<compile_context>
chip_gen: v7x
topology: tpu7x:2x2x1
jax: 0.10.0
libtpu: 0.0.40
codegen_flags: <defaults>
</compile_context>

<pallas_src>
import jax
import jax.numpy as jnp
from jax.experimental import pallas as pl
from jax.experimental.pallas import tpu as pltpu


def _make_downsample_kernel(H: int, W: int, pad: int):
    S = H * W

    def kernel(x_ref, w1_ref, b1_ref, w2_ref, b2_ref, m_ref,
               o_ref, xbuf, ybuf):
        # x_ref : (1, Cin, S)      flattened NCHW input pixels for one batch
        # w1_ref: (9, Cmid, Cin)   conv1 taps, t = kh*3 + kw
        # b1_ref: (Cmid, 1)
        # w2_ref: (9, Cout, Cmid)  conv2 taps
        # b2_ref: (Cout, 1)
        # m_ref : (2, S)           [left-neighbor-valid, right-neighbor-valid]
        # o_ref : (1, Cout, S)
        # xbuf  : VMEM (Cin,  S + 2*pad)  zero-padded flat input
        # ybuf  : VMEM (Cmid, S + 2*pad)  zero-padded flat conv1 output
        left_ok = m_ref[0:1, :]    # (1, S) 1.0 where w > 0
        right_ok = m_ref[1:2, :]   # (1, S) 1.0 where w < W-1

        def conv3x3_relu(src_buf, w_ref, b_ref):
            cout = w_ref.shape[1]
            acc = jnp.zeros((cout, S), jnp.float32)
            for kh in range(3):
                for kw in range(3):
                    shift = (kh - 1) * W + (kw - 1)
                    slab = src_buf[:, pad + shift: pad + shift + S]  # (C, S)
                    if kw == 0:        # dw = -1: left column has no neighbor
                        slab = slab * left_ok
                    elif kw == 2:      # dw = +1: right column has no neighbor
                        slab = slab * right_ok
                    acc = acc + jnp.dot(w_ref[kh * 3 + kw], slab,
                                        preferred_element_type=jnp.float32)
            return jnp.maximum(acc + b_ref[...], 0.0)

        # Stage the flattened input into a zero-padded VMEM buffer (halo=pad).
        xbuf[...] = jnp.zeros_like(xbuf)
        xbuf[:, pad:pad + S] = x_ref[0]

        y1 = conv3x3_relu(xbuf, w1_ref, b1_ref)        # (Cmid, S)

        ybuf[...] = jnp.zeros_like(ybuf)
        ybuf[:, pad:pad + S] = y1

        y2 = conv3x3_relu(ybuf, w2_ref, b2_ref)        # (Cout, S)
        o_ref[0] = y2.astype(o_ref.dtype)              # lane-dense store

    return kernel


@jax.jit
def downsample(x_nchw, w1, b1, w2, b2):
    """relu(conv2(relu(conv1(x)))) with two 3x3, padding=1 convolutions.

    x_nchw : (N, Cin, H, W)      float32
    w1     : (Cmid, Cin, 3, 3)   PyTorch Conv2d weight layout (OIHW)
    b1     : (Cmid,)
    w2     : (Cout, Cmid, 3, 3)
    b2     : (Cout,)
    returns: (N, Cout, H, W)     float32
    """
    N, Cin, H, W = x_nchw.shape
    Cmid = w1.shape[0]
    Cout = w2.shape[0]
    S = H * W
    pad = pl.cdiv(W + 1, 128) * 128          # lane-aligned halo, >= W + 1

    # Free, contiguous reshapes / tiny weight rearrangements (no big HBM pass).
    x_flat = x_nchw.reshape(N, Cin, S)
    w1t = jnp.transpose(w1, (2, 3, 0, 1)).reshape(9, Cmid, Cin)
    w2t = jnp.transpose(w2, (2, 3, 0, 1)).reshape(9, Cout, Cmid)
    b1c = b1.reshape(Cmid, 1)
    b2c = b2.reshape(Cout, 1)

    col = jnp.arange(S, dtype=jnp.int32) % W
    masks = jnp.stack([(col > 0).astype(jnp.float32),
                       (col < W - 1).astype(jnp.float32)], axis=0)   # (2, S)

    kernel = _make_downsample_kernel(H, W, pad)

    out_flat = pl.pallas_call(
        kernel,
        out_shape=jax.ShapeDtypeStruct((N, Cout, S), jnp.float32),
        grid_spec=pltpu.PrefetchScalarGridSpec(
            num_scalar_prefetch=0,
            grid=(N,),
            in_specs=[
                pl.BlockSpec((1, Cin, S), lambda n: (n, 0, 0)),
                pl.BlockSpec((9, Cmid, Cin), lambda n: (0, 0, 0)),
                pl.BlockSpec((Cmid, 1), lambda n: (0, 0)),
                pl.BlockSpec((9, Cout, Cmid), lambda n: (0, 0, 0)),
                pl.BlockSpec((Cout, 1), lambda n: (0, 0)),
                pl.BlockSpec((2, S), lambda n: (0, 0)),
            ],
            out_specs=pl.BlockSpec((1, Cout, S), lambda n: (n, 0, 0)),
            scratch_shapes=[
                pltpu.VMEM((Cin, S + 2 * pad), jnp.float32),
                pltpu.VMEM((Cmid, S + 2 * pad), jnp.float32),
            ]),
        compiler_params=pltpu.CompilerParams(
            dimension_semantics=("parallel",)),
    )(x_flat, w1t, b1c, w2t, b2c, masks)

    return out_flat.reshape(N, Cout, H, W)


def _reference(x, w1, b1, w2, b2):
    dn = ("NCHW", "OIHW", "NCHW")
    y = jax.lax.conv_general_dilated(
        x, w1, window_strides=(1, 1), padding="SAME",
        dimension_numbers=dn, precision=jax.lax.Precision.HIGHEST)
    y = jnp.maximum(y + b1[None, :, None, None], 0.0)
    y = jax.lax.conv_general_dilated(
        y, w2, window_strides=(1, 1), padding="SAME",
        dimension_numbers=dn, precision=jax.lax.Precision.HIGHEST)
    return jnp.maximum(y + b2[None, :, None, None], 0.0)


if __name__ == "__main__":
    key = jax.random.PRNGKey(0)
    k1, k2, k3, k4, k5 = jax.random.split(key, 5)

    N, Cin, Cout, H, W = 2, 4, 8, 16, 16
    x = jax.random.normal(k1, (N, Cin, H, W), dtype=jnp.float32)
    w1 = (jax.random.normal(k2, (Cout, Cin, 3, 3), dtype=jnp.float32)
          / jnp.sqrt(Cin * 9.0))
    b1 = jax.random.normal(k3, (Cout,), dtype=jnp.float32) * 0.1
    w2 = (jax.random.normal(k4, (Cout, Cout, 3, 3), dtype=jnp.float32)
          / jnp.sqrt(Cout * 9.0))
    b2 = jax.random.normal(k5, (Cout,), dtype=jnp.float32) * 0.1

    out = jax.block_until_ready(downsample(x, w1, b1, w2, b2))
    ref = _reference(x, w1, b1, w2, b2)

    assert out.shape == (N, Cout, H, W), out.shape
    err = float(jnp.max(jnp.abs(out - ref)))
    assert err < 1e-2, f"max abs err {err}"
    print("KERNEL_OK")
</pallas_src>

<mosaic_0001>
module attributes {stable_mosaic.version = 11 : i64} {
  func.func @kernel(%arg0: i32, %arg1: memref<1x4x256xf32, #tpu.memory_space<vmem>>, %arg2: memref<9x8x4xf32, #tpu.memory_space<vmem>>, %arg3: memref<8x1xf32, #tpu.memory_space<vmem>>, %arg4: memref<9x8x8xf32, #tpu.memory_space<vmem>>, %arg5: memref<8x1xf32, #tpu.memory_space<vmem>>, %arg6: memref<2x256xf32, #tpu.memory_space<vmem>>, %arg7: memref<1x8x256xf32, #tpu.memory_space<vmem>>, %arg8: memref<4x512xf32, #tpu.memory_space<vmem>>, %arg9: memref<8x512xf32, #tpu.memory_space<vmem>>) attributes {dimension_semantics = [#tpu.dimension_semantics<parallel>], iteration_bounds = array<i64: 2>, scalar_prefetch = 0 : i64, scratch_operands = 2 : i64, tpu.core_type = #tpu.core_type<tc>, window_params = [{transform_indices = @transform_0, window_bounds = array<i64: 1, 4, 256>}, {pipeline_mode = #tpu.pipeline_mode<synchronous>, transform_indices = @transform_1, window_bounds = array<i64: 9, 8, 4>}, {pipeline_mode = #tpu.pipeline_mode<synchronous>, transform_indices = @transform_2, window_bounds = array<i64: 8, 1>}, {pipeline_mode = #tpu.pipeline_mode<synchronous>, transform_indices = @transform_3, window_bounds = array<i64: 9, 8, 8>}, {pipeline_mode = #tpu.pipeline_mode<synchronous>, transform_indices = @transform_4, window_bounds = array<i64: 8, 1>}, {pipeline_mode = #tpu.pipeline_mode<synchronous>, transform_indices = @transform_5, window_bounds = array<i64: 2, 256>}, {transform_indices = @transform_6, window_bounds = array<i64: 1, 8, 256>}]} {
    %c0 = arith.constant 0 : index
    %c0_0 = arith.constant 0 : index
    %0 = vector.load %arg6[%c0, %c0_0] : memref<2x256xf32, #tpu.memory_space<vmem>>, vector<1x256xf32>
    %c1 = arith.constant 1 : index
    %c0_1 = arith.constant 0 : index
    %1 = vector.load %arg6[%c1, %c0_1] : memref<2x256xf32, #tpu.memory_space<vmem>>, vector<1x256xf32>
    %cst = arith.constant 0.000000e+00 : f32
    %2 = vector.broadcast %cst : f32 to vector<4x512xf32>
    %c0_2 = arith.constant 0 : index
    %c0_3 = arith.constant 0 : index
    %3 = vector.load %arg8[%c0_2, %c0_3] : memref<4x512xf32, #tpu.memory_space<vmem>>, vector<4x512xf32>
    tpu.vector_store %arg8[%c0_2, %c0_3], %2 {strides = array<i32>} : memref<4x512xf32, #tpu.memory_space<vmem>>, vector<4x512xf32>,
    %c0_4 = arith.constant 0 : index
    %c0_5 = arith.constant 0 : index
    %c0_6 = arith.constant 0 : index
    %4 = vector.load %arg1[%c0_4, %c0_5, %c0_6] : memref<1x4x256xf32, #tpu.memory_space<vmem>>, vector<1x4x256xf32>
    %5 = vector.shape_cast %4 : vector<1x4x256xf32> to vector<4x256xf32>
    %c0_7 = arith.constant 0 : index
    %c128 = arith.constant 128 : index
    %6 = vector.load %arg8[%c0_7, %c128] : memref<4x512xf32, #tpu.memory_space<vmem>>, vector<4x256xf32>
    tpu.vector_store %arg8[%c0_7, %c128], %5 {strides = array<i32>} : memref<4x512xf32, #tpu.memory_space<vmem>>, vector<4x256xf32>,
    %cst_8 = arith.constant 0.000000e+00 : f32
    %7 = vector.broadcast %cst_8 : f32 to vector<8x256xf32>
    %c0_9 = arith.constant 0 : index
    %c111 = arith.constant 111 : index
    %8 = vector.load %arg8[%c0_9, %c111] : memref<4x512xf32, #tpu.memory_space<vmem>>, vector<4x256xf32>
    %9 = vector.broadcast %0 : vector<1x256xf32> to vector<4x256xf32>
    %10 = arith.mulf %8, %9 : vector<4x256xf32>
    %c0_10 = arith.constant 0 : index
    %c0_11 = arith.constant 0 : index
    %c0_12 = arith.constant 0 : index
    %11 = vector.load %arg2[%c0_10, %c0_11, %c0_12] : memref<9x8x4xf32, #tpu.memory_space<vmem>>, vector<1x8x4xf32>
    %12 = vector.shape_cast %11 : vector<1x8x4xf32> to vector<8x4xf32>
    %cst_13 = arith.constant dense<0.000000e+00> : vector<8x256xf32>
    %13 = tpu.matmul %12, %10, %cst_13 {dimension_numbers = #tpu.dot_dimension_numbers<[1], [0], [0], [1], [0, 0, 1, 1], [], []>} : vector<8x4xf32>, vector<4x256xf32>, vector<8x256xf32> -> vector<8x256xf32>
    %14 = arith.addf %7, %13 : vector<8x256xf32>
    %c0_14 = arith.constant 0 : index
    %c112 = arith.constant 112 : index
    %15 = vector.load %arg8[%c0_14, %c112] : memref<4x512xf32, #tpu.memory_space<vmem>>, vector<4x256xf32>
    %c1_15 = arith.constant 1 : index
    %c0_16 = arith.constant 0 : index
    %c0_17 = arith.constant 0 : index
    %16 = vector.load %arg2[%c1_15, %c0_16, %c0_17] : memref<9x8x4xf32, #tpu.memory_space<vmem>>, vector<1x8x4xf32>
    %17 = vector.shape_cast %16 : vector<1x8x4xf32> to vector<8x4xf32>
    %cst_18 = arith.constant dense<0.000000e+00> : vector<8x256xf32>
    %18 = tpu.matmul %17, %15, %cst_18 {dimension_numbers = #tpu.dot_dimension_numbers<[1], [0], [0], [1], [0, 0, 1, 1], [], []>} : vector<8x4xf32>, vector<4x256xf32>, vector<8x256xf32> -> vector<8x256xf32>
    %19 = arith.addf %14, %18 : vector<8x256xf32>
    %c0_19 = arith.constant 0 : index
    %c113 = arith.constant 113 : index
    %20 = vector.load %arg8[%c0_19, %c113] : memref<4x512xf32, #tpu.memory_space<vmem>>, vector<4x256xf32>
    %21 = vector.broadcast %1 : vector<1x256xf32> to vector<4x256xf32>
    %22 = arith.mulf %20, %21 : vector<4x256xf32>
    %c2 = arith.constant 2 : index
    %c0_20 = arith.constant 0 : index
    %c0_21 = arith.constant 0 : index
    %23 = vector.load %arg2[%c2, %c0_20, %c0_21] : memref<9x8x4xf32, #tpu.memory_space<vmem>>, vector<1x8x4xf32>
    %24 = vector.shape_cast %23 : vector<1x8x4xf32> to vector<8x4xf32>
    %cst_22 = arith.constant dense<0.000000e+00> : vector<8x256xf32>
    %25 = tpu.matmul %24, %22, %cst_22 {dimension_numbers = #tpu.dot_dimension_numbers<[1], [0], [0], [1], [0, 0, 1, 1], [], []>} : vector<8x4xf32>, vector<4x256xf32>, vector<8x256xf32> -> vector<8x256xf32>
    %26 = arith.addf %19, %25 : vector<8x256xf32>
    %c0_23 = arith.constant 0 : index
    %c127 = arith.constant 127 : index
    %27 = vector.load %arg8[%c0_23, %c127] : memref<4x512xf32, #tpu.memory_space<vmem>>, vector<4x256xf32>
    %28 = vector.broadcast %0 : vector<1x256xf32> to vector<4x256xf32>
    %29 = arith.mulf %27, %28 : vector<4x256xf32>
    %c3 = arith.constant 3 : index
    %c0_24 = arith.constant 0 : index
    %c0_25 = arith.constant 0 : index
    %30 = vector.load %arg2[%c3, %c0_24, %c0_25] : memref<9x8x4xf32, #tpu.memory_space<vmem>>, vector<1x8x4xf32>
    %31 = vector.shape_cast %30 : vector<1x8x4xf32> to vector<8x4xf32>
    %cst_26 = arith.constant dense<0.000000e+00> : vector<8x256xf32>
    %32 = tpu.matmul %31, %29, %cst_26 {dimension_numbers = #tpu.dot_dimension_numbers<[1], [0], [0], [1], [0, 0, 1, 1], [], []>} : vector<8x4xf32>, vector<4x256xf32>, vector<8x256xf32> -> vector<8x256xf32>
    %33 = arith.addf %26, %32 : vector<8x256xf32>
    %c0_27 = arith.constant 0 : index
    %c128_28 = arith.constant 128 : index
    %34 = vector.load %arg8[%c0_27, %c128_28] : memref<4x512xf32, #tpu.memory_space<vmem>>, vector<4x256xf32>
    %c4 = arith.constant 4 : index
    %c0_29 = arith.constant 0 : index
    %c0_30 = arith.constant 0 : index
    %35 = vector.load %arg2[%c4, %c0_29, %c0_30] : memref<9x8x4xf32, #tpu.memory_space<vmem>>, vector<1x8x4xf32>
    %36 = vector.shape_cast %35 : vector<1x8x4xf32> to vector<8x4xf32>
    %cst_31 = arith.constant dense<0.000000e+00> : vector<8x256xf32>
    %37 = tpu.matmul %36, %34, %cst_31 {dimension_numbers = #tpu.dot_dimension_numbers<[1], [0], [0], [1], [0, 0, 1, 1], [], []>} : vector<8x4xf32>, vector<4x256xf32>, vector<8x256xf32> -> vector<8x256xf32>
    %38 = arith.addf %33, %37 : vector<8x256xf32>
    %c0_32 = arith.constant 0 : index
    %c129 = arith.constant 129 : index
    %39 = vector.load %arg8[%c0_32, %c129] : memref<4x512xf32, #tpu.memory_space<vmem>>, vector<4x256xf32>
    %40 = vector.broadcast %1 : vector<1x256xf32> to vector<4x256xf32>
    %41 = arith.mulf %39, %40 : vector<4x256xf32>
    %c5 = arith.constant 5 : index
    %c0_33 = arith.constant 0 : index
    %c0_34 = arith.constant 0 : index
    %42 = vector.load %arg2[%c5, %c0_33, %c0_34] : memref<9x8x4xf32, #tpu.memory_space<vmem>>, vector<1x8x4xf32>
    %43 = vector.shape_cast %42 : vector<1x8x4xf32> to vector<8x4xf32>
    %cst_35 = arith.constant dense<0.000000e+00> : vector<8x256xf32>
    %44 = tpu.matmul %43, %41, %cst_35 {dimension_numbers = #tpu.dot_dimension_numbers<[1], [0], [0], [1], [0, 0, 1, 1], [], []>} : vector<8x4xf32>, vector<4x256xf32>, vector<8x256xf32> -> vector<8x256xf32>
    %45 = arith.addf %38, %44 : vector<8x256xf32>
    %c0_36 = arith.constant 0 : index
    %c143 = arith.constant 143 : index
    %46 = vector.load %arg8[%c0_36, %c143] : memref<4x512xf32, #tpu.memory_space<vmem>>, vector<4x256xf32>
    %47 = vector.broadcast %0 : vector<1x256xf32> to vector<4x256xf32>
    %48 = arith.mulf %46, %47 : vector<4x256xf32>
    %c6 = arith.constant 6 : index
    %c0_37 = arith.constant 0 : index
    %c0_38 = arith.constant 0 : index
    %49 = vector.load %arg2[%c6, %c0_37, %c0_38] : memref<9x8x4xf32, #tpu.memory_space<vmem>>, vector<1x8x4xf32>
    %50 = vector.shape_cast %49 : vector<1x8x4xf32> to vector<8x4xf32>
    %cst_39 = arith.constant dense<0.000000e+00> : vector<8x256xf32>
    %51 = tpu.matmul %50, %48, %cst_39 {dimension_numbers = #tpu.dot_dimension_numbers<[1], [0], [0], [1], [0, 0, 1, 1], [], []>} : vector<8x4xf32>, vector<4x256xf32>, vector<8x256xf32> -> vector<8x256xf32>
    %52 = arith.addf %45, %51 : vector<8x256xf32>
    %c0_40 = arith.constant 0 : index
    %c144 = arith.constant 144 : index
    %53 = vector.load %arg8[%c0_40, %c144] : memref<4x512xf32, #tpu.memory_space<vmem>>, vector<4x256xf32>
    %c7 = arith.constant 7 : index
    %c0_41 = arith.constant 0 : index
    %c0_42 = arith.constant 0 : index
    %54 = vector.load %arg2[%c7, %c0_41, %c0_42] : memref<9x8x4xf32, #tpu.memory_space<vmem>>, vector<1x8x4xf32>
    %55 = vector.shape_cast %54 : vector<1x8x4xf32> to vector<8x4xf32>
    %cst_43 = arith.constant dense<0.000000e+00> : vector<8x256xf32>
    %56 = tpu.matmul %55, %53, %cst_43 {dimension_numbers = #tpu.dot_dimension_numbers<[1], [0], [0], [1], [0, 0, 1, 1], [], []>} : vector<8x4xf32>, vector<4x256xf32>, vector<8x256xf32> -> vector<8x256xf32>
    %57 = arith.addf %52, %56 : vector<8x256xf32>
    %c0_44 = arith.constant 0 : index
    %c145 = arith.constant 145 : index
    %58 = vector.load %arg8[%c0_44, %c145] : memref<4x512xf32, #tpu.memory_space<vmem>>, vector<4x256xf32>
    %59 = vector.broadcast %1 : vector<1x256xf32> to vector<4x256xf32>
    %60 = arith.mulf %58, %59 : vector<4x256xf32>
    %c8 = arith.constant 8 : index
    %c0_45 = arith.constant 0 : index
    %c0_46 = arith.constant 0 : index
    %61 = vector.load %arg2[%c8, %c0_45, %c0_46] : memref<9x8x4xf32, #tpu.memory_space<vmem>>, vector<1x8x4xf32>
    %62 = vector.shape_cast %61 : vector<1x8x4xf32> to vector<8x4xf32>
    %cst_47 = arith.constant dense<0.000000e+00> : vector<8x256xf32>
    %63 = tpu.matmul %62, %60, %cst_47 {dimension_numbers = #tpu.dot_dimension_numbers<[1], [0], [0], [1], [0, 0, 1, 1], [], []>} : vector<8x4xf32>, vector<4x256xf32>, vector<8x256xf32> -> vector<8x256xf32>
    %64 = arith.addf %57, %63 : vector<8x256xf32>
    %c0_48 = arith.constant 0 : index
    %c0_49 = arith.constant 0 : index
    %65 = vector.load %arg3[%c0_48, %c0_49] : memref<8x1xf32, #tpu.memory_space<vmem>>, vector<8x1xf32>
    %66 = vector.broadcast %65 : vector<8x1xf32> to vector<8x256xf32>
    %67 = arith.addf %64, %66 : vector<8x256xf32>
    %cst_50 = arith.constant 0.000000e+00 : f32
    %68 = vector.broadcast %cst_50 : f32 to vector<8x256xf32>
    %69 = arith.maximumf %67, %68 : vector<8x256xf32>
    %cst_51 = arith.constant 0.000000e+00 : f32
    %70 = vector.broadcast %cst_51 : f32 to vector<8x512xf32>
    %c0_52 = arith.constant 0 : index
    %c0_53 = arith.constant 0 : index
    %71 = vector.load %arg9[%c0_52, %c0_53] : memref<8x512xf32, #tpu.memory_space<vmem>>, vector<8x512xf32>
    tpu.vector_store %arg9[%c0_52, %c0_53], %70 {strides = array<i32>} : memref<8x512xf32, #tpu.memory_space<vmem>>, vector<8x512xf32>,
    %c0_54 = arith.constant 0 : index
    %c128_55 = arith.constant 128 : index
    %72 = vector.load %arg9[%c0_54, %c128_55] : memref<8x512xf32, #tpu.memory_space<vmem>>, vector<8x256xf32>
    tpu.vector_store %arg9[%c0_54, %c128_55], %69 {strides = array<i32>} : memref<8x512xf32, #tpu.memory_space<vmem>>, vector<8x256xf32>,
    %cst_56 = arith.constant 0.000000e+00 : f32
    %73 = vector.broadcast %cst_56 : f32 to vector<8x256xf32>
    %c0_57 = arith.constant 0 : index
    %c111_58 = arith.constant 111 : index
    %74 = vector.load %arg9[%c0_57, %c111_58] : memref<8x512xf32, #tpu.memory_space<vmem>>, vector<8x256xf32>
    %75 = vector.broadcast %0 : vector<1x256xf32> to vector<8x256xf32>
    %76 = arith.mulf %74, %75 : vector<8x256xf32>
    %c0_59 = arith.constant 0 : index
    %c0_60 = arith.constant 0 : index
    %c0_61 = arith.constant 0 : index
    %77 = vector.load %arg4[%c0_59, %c0_60, %c0_61] : memref<9x8x8xf32, #tpu.memory_space<vmem>>, vector<1x8x8xf32>
    %78 = vector.shape_cast %77 : vector<1x8x8xf32> to vector<8x8xf32>
    %cst_62 = arith.constant dense<0.000000e+00> : vector<8x256xf32>
    %79 = tpu.matmul %78, %76, %cst_62 {dimension_numbers = #tpu.dot_dimension_numbers<[1], [0], [0], [1], [0, 0, 1, 1], [], []>} : vector<8x8xf32>, vector<8x256xf32>, vector<8x256xf32> -> vector<8x256xf32>
    %80 = arith.addf %73, %79 : vector<8x256xf32>
    %c0_63 = arith.constant 0 : index
    %c112_64 = arith.constant 112 : index
    %81 = vector.load %arg9[%c0_63, %c112_64] : memref<8x512xf32, #tpu.memory_space<vmem>>, vector<8x256xf32>
    %c1_65 = arith.constant 1 : index
    %c0_66 = arith.constant 0 : index
    %c0_67 = arith.constant 0 : index
    %82 = vector.load %arg4[%c1_65, %c0_66, %c0_67] : memref<9x8x8xf32, #tpu.memory_space<vmem>>, vector<1x8x8xf32>
    %83 = vector.shape_cast %82 : vector<1x8x8xf32> to vector<8x8xf32>
    %cst_68 = arith.constant dense<0.000000e+00> : vector<8x256xf32>
    %84 = tpu.matmul %83, %81, %cst_68 {dimension_numbers = #tpu.dot_dimension_numbers<[1], [0], [0], [1], [0, 0, 1, 1], [], []>} : vector<8x8xf32>, vector<8x256xf32>, vector<8x256xf32> -> vector<8x256xf32>
    %85 = arith.addf %80, %84 : vector<8x256xf32>
    %c0_69 = arith.constant 0 : index
    %c113_70 = arith.constant 113 : index
    %86 = vector.load %arg9[%c0_69, %c113_70] : memref<8x512xf32, #tpu.memory_space<vmem>>, vector<8x256xf32>
    %87 = vector.broadcast %1 : vector<1x256xf32> to vector<8x256xf32>
    %88 = arith.mulf %86, %87 : vector<8x256xf32>
    %c2_71 = arith.constant 2 : index
    %c0_72 = arith.constant 0 : index
    %c0_73 = arith.constant 0 : index
    %89 = vector.load %arg4[%c2_71, %c0_72, %c0_73] : memref<9x8x8xf32, #tpu.memory_space<vmem>>, vector<1x8x8xf32>
    %90 = vector.shape_cast %89 : vector<1x8x8xf32> to vector<8x8xf32>
    %cst_74 = arith.constant dense<0.000000e+00> : vector<8x256xf32>
    %91 = tpu.matmul %90, %88, %cst_74 {dimension_numbers = #tpu.dot_dimension_numbers<[1], [0], [0], [1], [0, 0, 1, 1], [], []>} : vector<8x8xf32>, vector<8x256xf32>, vector<8x256xf32> -> vector<8x256xf32>
    %92 = arith.addf %85, %91 : vector<8x256xf32>
    %c0_75 = arith.constant 0 : index
    %c127_76 = arith.constant 127 : index
    %93 = vector.load %arg9[%c0_75, %c127_76] : memref<8x512xf32, #tpu.memory_space<vmem>>, vector<8x256xf32>
    %94 = vector.broadcast %0 : vector<1x256xf32> to vector<8x256xf32>
    %95 = arith.mulf %93, %94 : vector<8x256xf32>
    %c3_77 = arith.constant 3 : index
    %c0_78 = arith.constant 0 : index
    %c0_79 = arith.constant 0 : index
    %96 = vector.load %arg4[%c3_77, %c0_78, %c0_79] : memref<9x8x8xf32, #tpu.memory_space<vmem>>, vector<1x8x8xf32>
    %97 = vector.shape_cast %96 : vector<1x8x8xf32> to vector<8x8xf32>
    %cst_80 = arith.constant dense<0.000000e+00> : vector<8x256xf32>
    %98 = tpu.matmul %97, %95, %cst_80 {dimension_numbers = #tpu.dot_dimension_numbers<[1], [0], [0], [1], [0, 0, 1, 1], [], []>} : vector<8x8xf32>, vector<8x256xf32>, vector<8x256xf32> -> vector<8x256xf32>
    %99 = arith.addf %92, %98 : vector<8x256xf32>
    %c0_81 = arith.constant 0 : index
    %c128_82 = arith.constant 128 : index
    %100 = vector.load %arg9[%c0_81, %c128_82] : memref<8x512xf32, #tpu.memory_space<vmem>>, vector<8x256xf32>
    %c4_83 = arith.constant 4 : index
    %c0_84 = arith.constant 0 : index
    %c0_85 = arith.constant 0 : index
    %101 = vector.load %arg4[%c4_83, %c0_84, %c0_85] : memref<9x8x8xf32, #tpu.memory_space<vmem>>, vector<1x8x8xf32>
    %102 = vector.shape_cast %101 : vector<1x8x8xf32> to vector<8x8xf32>
    %cst_86 = arith.constant dense<0.000000e+00> : vector<8x256xf32>
    %103 = tpu.matmul %102, %100, %cst_86 {dimension_numbers = #tpu.dot_dimension_numbers<[1], [0], [0], [1], [0, 0, 1, 1], [], []>} : vector<8x8xf32>, vector<8x256xf32>, vector<8x256xf32> -> vector<8x256xf32>
    %104 = arith.addf %99, %103 : vector<8x256xf32>
    %c0_87 = arith.constant 0 : index
    %c129_88 = arith.constant 129 : index
    %105 = vector.load %arg9[%c0_87, %c129_88] : memref<8x512xf32, #tpu.memory_space<vmem>>, vector<8x256xf32>
    %106 = vector.broadcast %1 : vector<1x256xf32> to vector<8x256xf32>
    %107 = arith.mulf %105, %106 : vector<8x256xf32>
    %c5_89 = arith.constant 5 : index
    %c0_90 = arith.constant 0 : index
    %c0_91 = arith.constant 0 : index
    %108 = vector.load %arg4[%c5_89, %c0_90, %c0_91] : memref<9x8x8xf32, #tpu.memory_space<vmem>>, vector<1x8x8xf32>
    %109 = vector.shape_cast %108 : vector<1x8x8xf32> to vector<8x8xf32>
    %cst_92 = arith.constant dense<0.000000e+00> : vector<8x256xf32>
    %110 = tpu.matmul %109, %107, %cst_92 {dimension_numbers = #tpu.dot_dimension_numbers<[1], [0], [0], [1], [0, 0, 1, 1], [], []>} : vector<8x8xf32>, vector<8x256xf32>, vector<8x256xf32> -> vector<8x256xf32>
    %111 = arith.addf %104, %110 : vector<8x256xf32>
    %c0_93 = arith.constant 0 : index
    %c143_94 = arith.constant 143 : index
    %112 = vector.load %arg9[%c0_93, %c143_94] : memref<8x512xf32, #tpu.memory_space<vmem>>, vector<8x256xf32>
    %113 = vector.broadcast %0 : vector<1x256xf32> to vector<8x256xf32>
    %114 = arith.mulf %112, %113 : vector<8x256xf32>
    %c6_95 = arith.constant 6 : index
    %c0_96 = arith.constant 0 : index
    %c0_97 = arith.constant 0 : index
    %115 = vector.load %arg4[%c6_95, %c0_96, %c0_97] : memref<9x8x8xf32, #tpu.memory_space<vmem>>, vector<1x8x8xf32>
    %116 = vector.shape_cast %115 : vector<1x8x8xf32> to vector<8x8xf32>
    %cst_98 = arith.constant dense<0.000000e+00> : vector<8x256xf32>
    %117 = tpu.matmul %116, %114, %cst_98 {dimension_numbers = #tpu.dot_dimension_numbers<[1], [0], [0], [1], [0, 0, 1, 1], [], []>} : vector<8x8xf32>, vector<8x256xf32>, vector<8x256xf32> -> vector<8x256xf32>
    %118 = arith.addf %111, %117 : vector<8x256xf32>
    %c0_99 = arith.constant 0 : index
    %c144_100 = arith.constant 144 : index
    %119 = vector.load %arg9[%c0_99, %c144_100] : memref<8x512xf32, #tpu.memory_space<vmem>>, vector<8x256xf32>
    %c7_101 = arith.constant 7 : index
    %c0_102 = arith.constant 0 : index
    %c0_103 = arith.constant 0 : index
    %120 = vector.load %arg4[%c7_101, %c0_102, %c0_103] : memref<9x8x8xf32, #tpu.memory_space<vmem>>, vector<1x8x8xf32>
    %121 = vector.shape_cast %120 : vector<1x8x8xf32> to vector<8x8xf32>
    %cst_104 = arith.constant dense<0.000000e+00> : vector<8x256xf32>
    %122 = tpu.matmul %121, %119, %cst_104 {dimension_numbers = #tpu.dot_dimension_numbers<[1], [0], [0], [1], [0, 0, 1, 1], [], []>} : vector<8x8xf32>, vector<8x256xf32>, vector<8x256xf32> -> vector<8x256xf32>
    %123 = arith.addf %118, %122 : vector<8x256xf32>
    %c0_105 = arith.constant 0 : index
    %c145_106 = arith.constant 145 : index
    %124 = vector.load %arg9[%c0_105, %c145_106] : memref<8x512xf32, #tpu.memory_space<vmem>>, vector<8x256xf32>
    %125 = vector.broadcast %1 : vector<1x256xf32> to vector<8x256xf32>
    %126 = arith.mulf %124, %125 : vector<8x256xf32>
    %c8_107 = arith.constant 8 : index
    %c0_108 = arith.constant 0 : index
    %c0_109 = arith.constant 0 : index
    %127 = vector.load %arg4[%c8_107, %c0_108, %c0_109] : memref<9x8x8xf32, #tpu.memory_space<vmem>>, vector<1x8x8xf32>
    %128 = vector.shape_cast %127 : vector<1x8x8xf32> to vector<8x8xf32>
    %cst_110 = arith.constant dense<0.000000e+00> : vector<8x256xf32>
    %129 = tpu.matmul %128, %126, %cst_110 {dimension_numbers = #tpu.dot_dimension_numbers<[1], [0], [0], [1], [0, 0, 1, 1], [], []>} : vector<8x8xf32>, vector<8x256xf32>, vector<8x256xf32> -> vector<8x256xf32>
    %130 = arith.addf %123, %129 : vector<8x256xf32>
    %c0_111 = arith.constant 0 : index
    %c0_112 = arith.constant 0 : index
    %131 = vector.load %arg5[%c0_111, %c0_112] : memref<8x1xf32, #tpu.memory_space<vmem>>, vector<8x1xf32>
    %132 = vector.broadcast %131 : vector<8x1xf32> to vector<8x256xf32>
    %133 = arith.addf %130, %132 : vector<8x256xf32>
    %cst_113 = arith.constant 0.000000e+00 : f32
    %134 = vector.broadcast %cst_113 : f32 to vector<8x256xf32>
    %135 = arith.maximumf %133, %134 : vector<8x256xf32>
    %c0_114 = arith.constant 0 : index
    %c0_115 = arith.constant 0 : index
    %c0_116 = arith.constant 0 : index
    %136 = vector.load %arg7[%c0_114, %c0_115, %c0_116] : memref<1x8x256xf32, #tpu.memory_space<vmem>>, vector<1x8x256xf32>
    %137 = vector.shape_cast %136 : vector<1x8x256xf32> to vector<8x256xf32>
    %138 = vector.shape_cast %135 : vector<8x256xf32> to vector<1x8x256xf32>
    tpu.vector_store %arg7[%c0_114, %c0_115, %c0_116], %138 {strides = array<i32>} : memref<1x8x256xf32, #tpu.memory_space<vmem>>, vector<1x8x256xf32>,
    return
  }
  func.func @transform_0(%arg0: i32) -> (i32, i32, i32) {
    %c0_i32 = arith.constant 0 : i32
    %c0_i32_0 = arith.constant 0 : i32
    %c0_i32_1 = arith.constant 0 : i32
    return %arg0, %c0_i32, %c0_i32_0 : i32, i32, i32
  }
  func.func @transform_1(%arg0: i32) -> (i32, i32, i32) {
    %c0_i32 = arith.constant 0 : i32
    %c0_i32_0 = arith.constant 0 : i32
    %c0_i32_1 = arith.constant 0 : i32
    %c0_i32_2 = arith.constant 0 : i32
    return %c0_i32, %c0_i32_0, %c0_i32_1 : i32, i32, i32
  }
  func.func @transform_2(%arg0: i32) -> (i32, i32) {
    %c0_i32 = arith.constant 0 : i32
    %c0_i32_0 = arith.constant 0 : i32
    %c0_i32_1 = arith.constant 0 : i32
    return %c0_i32, %c0_i32_0 : i32, i32
  }
  func.func @transform_3(%arg0: i32) -> (i32, i32, i32) {
    %c0_i32 = arith.constant 0 : i32
    %c0_i32_0 = arith.constant 0 : i32
    %c0_i32_1 = arith.constant 0 : i32
    %c0_i32_2 = arith.constant 0 : i32
    return %c0_i32, %c0_i32_0, %c0_i32_1 : i32, i32, i32
  }
  func.func @transform_4(%arg0: i32) -> (i32, i32) {
    %c0_i32 = arith.constant 0 : i32
    %c0_i32_0 = arith.constant 0 : i32
    %c0_i32_1 = arith.constant 0 : i32
    return %c0_i32, %c0_i32_0 : i32, i32
  }
  func.func @transform_5(%arg0: i32) -> (i32, i32) {
    %c0_i32 = arith.constant 0 : i32
    %c0_i32_0 = arith.constant 0 : i32
    %c0_i32_1 = arith.constant 0 : i32
    return %c0_i32, %c0_i32_0 : i32, i32
  }
  func.func @transform_6(%arg0: i32) -> (i32, i32, i32) {
    %c0_i32 = arith.constant 0 : i32
    %c0_i32_0 = arith.constant 0 : i32
    %c0_i32_1 = arith.constant 0 : i32
    return %arg0, %c0_i32, %c0_i32_0 : i32, i32, i32
  }
}

</mosaic_0001>

<llo_original>
// kernel: downsample.1
$region0: #{downsample.1}
  #allocation0 [shape = 'u32[]', space=smem, size = 0x4, offset = 0x4, fixed_abs, tag = 'smem constant byte address 0x4 - core index']
  #allocation1 [shape = 'u32[144,128]{1,0:T(1,128)}', space=vmem, size = 0x12000, scoped, tag = 'internal scratch']
  #allocation2 [shape = 'f32[4,512]{1,0:T(4,128)}', space=vmem, size = 0x2000, scoped, tag = 'scratch operand']
  #allocation3 [shape = 'f32[8,512]{1,0:T(8,128)}', space=vmem, size = 0x4000, scoped, tag = 'scratch operand']
  %s0 = inlined_call_operand.vmem [shape: f32[2,4,256], index: 0, kind: input, shape index: {}]
  %s1 = inlined_call_operand.vmem [shape: f32[9,8,4], index: 1, kind: input, shape index: {}]
  %s2 = inlined_call_operand.vmem [shape: f32[8,1], index: 2, kind: input, shape index: {}]
  %s3 = inlined_call_operand.vmem [shape: f32[9,8,8], index: 3, kind: input, shape index: {}]
  %s4 = inlined_call_operand.vmem [shape: f32[8,1], index: 4, kind: input, shape index: {}]
  %s5 = inlined_call_operand.vmem [shape: f32[2,256], index: 5, kind: input, shape index: {}]
  %s6 = inlined_call_operand.vmem [shape: f32[2,8,256], index: 6, kind: output, shape index: {}]
  %s7 = sld [smem:[#allocation0]]
  $region57: #{downsample.1} parent=0
    _
  %s9 = ssub.s32 1, %s7
  %s10 = scalar_select 0, %s9, %s7
  loop: start=0, step=1, limit=4
  $region2: #{downsample.1} parent=0 // loop_pre_header
    _
  $region3: #{downsample.1} parent=0 // loop_header
    %s12 = sphi 0, %s16
    %p13 = scmp.ge.s32.totalorder %s12, 4
    %s22 = sphi 0, %s24
    %s25 = sphi 0, %s22
    %s26 = sphi 0, %s25
    %s42 = sphi 0, %s26
    %s46 = sphi 0, %s46
    %s48 = sphi 0, %s46
    %s49 = sphi 0, %s48
    %s63 = sphi 0, %s49
    %s67 = sphi 0, %s67
    %s69 = sphi 0, %s67
    %s70 = sphi 0, %s69
    %s84 = sphi 0, %s70
    %s88 = sphi 0, %s88
    %s90 = sphi 0, %s88
    %s91 = sphi 0, %s90
    %s105 = sphi 0, %s91
    %s109 = sphi 0, %s109
    %s111 = sphi 0, %s109
    %s112 = sphi 0, %s111
    %s126 = sphi 0, %s112
    %s130 = sphi 0, %s130
    %s132 = sphi 0, %s130
    %s133 = sphi 0, %s132
    %s147 = sphi 0, %s133
    %s153 = sphi 0, %s155
    %s156 = sphi 0, %s153
    %s157 = sphi 0, %s156
    %s173 = sphi 0, %s157
  $region4: #{downsample.1} parent=0 // loop_header_branch
    %15 = sbr.rel (%p13) target = $region8
  $region5: #{downsample.1} parent=0 // loop_body
    %s17 = ssub.s32 %s12, 1
    %s18 = ssub.s32 %s12, 2
    %s19 = sadd.s32 %s12, 1
    %s20 = ssub.s32 %s12, %s19
    %p21 = scmp.eq.s32.totalorder %s20, 0
    %s23 = sadd.s32 %s22, 1
    %s24 = scalar_select %p21, %s22, %s23
    %p27 = pneg %p21
    %p28 = scmp.eq.s32.totalorder %s12, 1
    %p29 = por %p27, %p28
    %p30 = scmp.ne.s32.totalorder %s22, %s25
    %p31 = scmp.eq.s32.totalorder %s12, 0
    %p32 = por %p30, %p31
    %p33 = scmp.ne.s32.totalorder %s22, %s25
    %p34 = scmp.eq.s32.totalorder %s17, 1
    %p35 = por %p33, %p34
    %p36 = scmp.ne.s32.totalorder %s25, %s26
    %p37 = scmp.eq.s32.totalorder %s17, 0
    %p38 = por %p36, %p37
    %p39 = scmp.ne.s32.totalorder %s25, %s26
    %p40 = scmp.eq.s32.totalorder %s18, 1
    %p41 = por %p39, %p40
    %p43 = scmp.ne.s32.totalorder %s26, %s42
    %p44 = scmp.eq.s32.totalorder %s18, 0
    %p45 = por %p43, %p44
    %s47 = sadd.s32 %s46, 1
    %p50 = scmp.eq.s32.totalorder %s12, 1
    %p51 = scmp.ne.s32.totalorder %s46, %s48
    %p52 = scmp.eq.s32.totalorder %s12, 0
    %p53 = por %p51, %p52
    %p54 = scmp.ne.s32.totalorder %s46, %s48
    %p55 = scmp.eq.s32.totalorder %s17, 1
    %p56 = por %p54, %p55
    %p57 = scmp.ne.s32.totalorder %s48, %s49
    %p58 = scmp.eq.s32.totalorder %s17, 0
    %p59 = por %p57, %p58
    %p60 = scmp.ne.s32.totalorder %s48, %s49
    %p61 = scmp.eq.s32.totalorder %s18, 1
    %p62 = por %p60, %p61
    %p64 = scmp.ne.s32.totalorder %s49, %s63
    %p65 = scmp.eq.s32.totalorder %s18, 0
    %p66 = por %p64, %p65
    %s68 = sadd.s32 %s67, 1
    %p71 = scmp.eq.s32.totalorder %s12, 1
    %p72 = scmp.ne.s32.totalorder %s67, %s69
    %p73 = scmp.eq.s32.totalorder %s12, 0
    %p74 = por %p72, %p73
    %p75 = scmp.ne.s32.totalorder %s67, %s69
    %p76 = scmp.eq.s32.totalorder %s17, 1
    %p77 = por %p75, %p76
    %p78 = scmp.ne.s32.totalorder %s69, %s70
    %p79 = scmp.eq.s32.totalorder %s17, 0
    %p80 = por %p78, %p79
    %p81 = scmp.ne.s32.totalorder %s69, %s70
    %p82 = scmp.eq.s32.totalorder %s18, 1
    %p83 = por %p81, %p82
    %p85 = scmp.ne.s32.totalorder %s70, %s84
    %p86 = scmp.eq.s32.totalorder %s18, 0
    %p87 = por %p85, %p86
    %s89 = sadd.s32 %s88, 1
    %p92 = scmp.eq.s32.totalorder %s12, 1
    %p93 = scmp.ne.s32.totalorder %s88, %s90
    %p94 = scmp.eq.s32.totalorder %s12, 0
    %p95 = por %p93, %p94
    %p96 = scmp.ne.s32.totalorder %s88, %s90
    %p97 = scmp.eq.s32.totalorder %s17, 1
    %p98 = por %p96, %p97
    %p99 = scmp.ne.s32.totalorder %s90, %s91
    %p100 = scmp.eq.s32.totalorder %s17, 0
    %p101 = por %p99, %p100
    %p102 = scmp.ne.s32.totalorder %s90, %s91
    %p103 = scmp.eq.s32.totalorder %s18, 1
    %p104 = por %p102, %p103
    %p106 = scmp.ne.s32.totalorder %s91, %s105
    %p107 = scmp.eq.s32.totalorder %s18, 0
    %p108 = por %p106, %p107
    %s110 = sadd.s32 %s109, 1
    %p113 = scmp.eq.s32.totalorder %s12, 1
    %p114 = scmp.ne.s32.totalorder %s109, %s111
    %p115 = scmp.eq.s32.totalorder %s12, 0
    %p116 = por %p114, %p115
    %p117 = scmp.ne.s32.totalorder %s109, %s111
    %p118 = scmp.eq.s32.totalorder %s17, 1
    %p119 = por %p117, %p118
    %p120 = scmp.ne.s32.totalorder %s111, %s112
    %p121 = scmp.eq.s32.totalorder %s17, 0
    %p122 = por %p120, %p121
    %p123 = scmp.ne.s32.totalorder %s111, %s112
    %p124 = scmp.eq.s32.totalorder %s18, 1
    %p125 = por %p123, %p124
    %p127 = scmp.ne.s32.totalorder %s112, %s126
    %p128 = scmp.eq.s32.totalorder %s18, 0
    %p129 = por %p127, %p128
    %s131 = sadd.s32 %s130, 1
    %p134 = scmp.eq.s32.totalorder %s12, 1
    %p135 = scmp.ne.s32.totalorder %s130, %s132
    %p136 = scmp.eq.s32.totalorder %s12, 0
    %p137 = por %p135, %p136
    %p138 = scmp.ne.s32.totalorder %s130, %s132
    %p139 = scmp.eq.s32.totalorder %s17, 1
    %p140 = por %p138, %p139
    %p141 = scmp.ne.s32.totalorder %s132, %s133
    %p142 = scmp.eq.s32.totalorder %s17, 0
    %p143 = por %p141, %p142
    %p144 = scmp.ne.s32.totalorder %s132, %s133
    %p145 = scmp.eq.s32.totalorder %s18, 1
    %p146 = por %p144, %p145
    %p148 = scmp.ne.s32.totalorder %s133, %s147
    %p149 = scmp.eq.s32.totalorder %s18, 0
    %p150 = por %p148, %p149
    %s151 = ssub.s32 %s12, %s19
    %p152 = scmp.eq.s32.totalorder %s151, 0
    %s154 = sadd.s32 %s153, 1
    %s155 = scalar_select %p152, %s153, %s154
    %p158 = pneg %p152
    %p159 = scmp.eq.s32.totalorder %s12, 1
    %p160 = por %p158, %p159
    %p161 = scmp.ne.s32.totalorder %s153, %s156
    %p162 = scmp.eq.s32.totalorder %s12, 0
    %p163 = por %p161, %p162
    %p164 = scmp.ne.s32.totalorder %s153, %s156
    %p165 = scmp.eq.s32.totalorder %s17, 1
    %p166 = por %p164, %p165
    %p167 = scmp.ne.s32.totalorder %s156, %s157
    %p168 = scmp.eq.s32.totalorder %s17, 0
    %p169 = por %p167, %p168
    %p170 = scmp.ne.s32.totalorder %s156, %s157
    %p171 = scmp.eq.s32.totalorder %s18, 1
    %p172 = por %p170, %p171
    %p174 = scmp.ne.s32.totalorder %s157, %s173
    %p175 = scmp.eq.s32.totalorder %s18, 0
    %p176 = por %p174, %p175
    %p177 = scmp.le.s32.totalorder 1, %s12
    %p178 = scmp.lt.s32.totalorder %s12, 3
    %p179 = pnand %p177, %p178
    %p180 = pneg %p179
    // Predicated region
    $region9: #{downsample.1} parent=5 // pred_check
      _
    $region10: #{downsample.1} parent=5 // pred_check_branch
      %182 = sbr.rel (%p179) target = $region12
    $region11: #{downsample.1} parent=5 // pred_region
      %s183 = ssub.s32 %s12, 1
      // Predicated region
      $region13: #{downsample.1} parent=11 // pred_check
        %p184 = pneg %p59
      $region14: #{downsample.1} parent=11 // pred_check_branch
        %186 = sbr.rel (%p184) target = $region16
      $region15: #{downsample.1} parent=11 // pred_region
        _
      $region16: #{downsample.1} parent=11 // pred_fallthru
        _
      // Predicated region
      $region17: #{downsample.1} parent=11 // pred_check
        %p187 = pneg %p80
      $region18: #{downsample.1} parent=11 // pred_check_branch
        %189 = sbr.rel (%p187) target = $region20
      $region19: #{downsample.1} parent=11 // pred_region
        _
      $region20: #{downsample.1} parent=11 // pred_fallthru
        _
      // Predicated region
      $region21: #{downsample.1} parent=11 // pred_check
        %p190 = pneg %p101
      $region22: #{downsample.1} parent=11 // pred_check_branch
        %192 = sbr.rel (%p190) target = $region24
      $region23: #{downsample.1} parent=11 // pred_region
        _
      $region24: #{downsample.1} parent=11 // pred_fallthru
        _
      // Predicated region
      $region25: #{downsample.1} parent=11 // pred_check
        %p193 = pneg %p122
      $region26: #{downsample.1} parent=11 // pred_check_branch
        %195 = sbr.rel (%p193) target = $region28
      $region27: #{downsample.1} parent=11 // pred_region
        _
      $region28: #{downsample.1} parent=11 // pred_fallthru
        _
      // Predicated region
      $region29: #{downsample.1} parent=11 // pred_check
        %p196 = pneg %p143
      $region30: #{downsample.1} parent=11 // pred_check_branch
        %198 = sbr.rel (%p196) target = $region32
      $region31: #{downsample.1} parent=11 // pred_region
        _
      $region32: #{downsample.1} parent=11 // pred_fallthru
        _
    $region12: #{downsample.1} parent=5 // pred_fallthru
      _
    %p199 = scmp.lt.s32.totalorder %s12, 2
    // Predicated region
    $region33: #{downsample.1} parent=5 // pred_check
      %p200 = pneg %p199
    $region34: #{downsample.1} parent=5 // pred_check_branch
      %202 = sbr.rel (%p200) target = $region36
    $region35: #{downsample.1} parent=5 // pred_region
      // Predicated region
      $region37: #{downsample.1} parent=35 // pred_check
        %p203 = pneg %p32
      $region38: #{downsample.1} parent=35 // pred_check_branch
        %205 = sbr.rel (%p203) target = $region40
      $region39: #{downsample.1} parent=35 // pred_region
        %p206 = scmp.lt.s32.totalorder %s12, 1
        %s207 = scalar_select %p206, %s12, 1
        %s208 = smul.addr %s207, 2
        %s209 = smul.addr %s208, 4
        %s210 = scalar_lea.vmem %s0, %s209
      $region40: #{downsample.1} parent=35 // pred_fallthru
        _
    $region36: #{downsample.1} parent=5 // pred_fallthru
      _
    %p211 = scmp.le.s32.totalorder 1, %s12
    %p212 = scmp.lt.s32.totalorder %s12, 3
    %p213 = pnand %p211, %p212
    %p214 = pneg %p213
    // Predicated region
    $region41: #{downsample.1} parent=5 // pred_check
      _
    $region42: #{downsample.1} parent=5 // pred_check_branch
      %216 = sbr.rel (%p213) target = $region44
    $region43: #{downsample.1} parent=5 // pred_region
      %s217 = ssub.s32 %s12, 1
      %p218 = scmp.lt.s32.totalorder %s17, 1
      %s219 = scalar_select %p218, %s17, 1
      %s220 = smul.addr %s219, 2
      %s221 = smul.addr %s220, 4
      %s222 = scalar_lea.vmem %s0, %s221
      %p223 = pneg %p38
      %p224 = pneg %p35
      %p225 = pneg %p59
      %p226 = pneg %p56
      %p227 = pneg %p80
      %p228 = pneg %p77
      %p229 = pneg %p101
      %p230 = pneg %p98
      %p231 = pneg %p122
      %p232 = pneg %p119
      %p233 = pneg %p143
      %p234 = pneg %p140
      %p235 = pneg %p169
      %p236 = pneg %p166
      %p237 = scmp.lt.s32.totalorder %s17, 1
      %s238 = scalar_select %p237, %s17, 1
      %s239 = smul.addr %s238, 2
      %s240 = smul.addr %s239, 8
      %s241 = scalar_lea.vmem %s6, %s240
      %p242 = scmp.lt.s32.totalorder %s17, 1
      %s243 = scalar_select %p242, %s17, 1
      %s244 = smul.addr %s243, 2
      %s245 = smul.addr %s244, 4
      %s246 = scalar_lea.vmem %s0, %s245
      %p247 = scmp.lt.s32.totalorder %s17, 1
      %s248 = scalar_select %p247, %s17, 1
      %s249 = smul.addr %s248, 2
      %s250 = smul.addr %s249, 8
      %s251 = scalar_lea.vmem %s6, %s250
      %v252 = vld [vmem:[%s5] ss:$2 sm:$0x3]
      %s253 = scalar_lea.vmem %s5, 1
      %v254 = vld [vmem:[%s253] ss:$2 sm:$0x3]
      %255 = vst [vmem:[#allocation2] sm:$0xff] 0.0
      %256 = vst [vmem:[#allocation2 + $0x8] sm:$0xff] 0.0
      %v257 = vld [vmem:[%s246] sm:$0xff]
      %258 = vst [vmem:[#allocation2 + $0x4] sm:$0xff] %v257
      %v259 = vld [vmem:[#allocation2] sm:$0xff]
      %v260 = vld [vmem:[#allocation2 + $0x8] sm:$0xf]
      %v262 = vlaneseq
      %v263 = vshrl.u32 %v262, 7
      %v264 = vsub.s32 0, %v263
      %v265 = vrot.slane %v252, %v264
      %v266 = vlaneseq
      %v267 = vshrl.u32 %v266, 7
      %v268 = vsub.s32 1, %v267
      %v269 = vrot.slane %v252, %v268
      %v270 = vcombine.low %v265, %v269
      %271 = vrot.lane.b32.xlu0 %v270, 111
      %v272 = vpop.permute.xlu0 %271
      %v273 = vrot.slane %v272, 4
      %vm274 = vcmask 908288
      %v275 = vsel %vm274, %v273, %v272
      %v278 = vmul.f32 %v259, %v275
      %v279 = vmul.f32 %v260, %v273
      %v280 = vld [vmem:[%s1] sm:$0xff]
      %s281 = scalar_lea.vmem %s1, 8
      %v282 = vld [vmem:[%s281] sm:$0xff]
      %v285 = vcombine.high %v259, %v259
      %286 = vrot.lane.b32.xlu0 %v259, 16
      %v287 = vpop.permute.xlu0 %286
      %288 = vrot.lane.b32.xlu0 %v285, 16
      %v289 = vpop.permute.xlu0 %288
      %290 = vrot.lane.b32.xlu0 %v260, 16
      %v291 = vpop.permute.xlu0 %290
      %vm292 = vcmask 130048
      %v293 = vsel %vm292, %v287, %v289
      %v294 = vsel %vm292, %v289, %v291
      %vm295 = vcmask 31744
      %v297 = vsel %vm295, %v282, 0
      %vm299 = vcmask 1043456
      %v300 = vsel %vm299, %v293, 0
      %v302 = vsel %vm299, %v294, 0
      %304 = vmatprep.subr.mxu0 %v302
      %305 = vmatpush1.msra.mxu0 %v300
      %306 = vmatprep.subr.mxu0 0.0
      %307 = vmatpush1.msra.mxu0 0.0
      %308 = vmatprep.subr.mxu0 0.0
      %309 = vmatpush1.msra.mxu0 0.0
      %310 = vmatprep.subr.mxu0 0.0
      %311 = vmatpush1.msra.mxu0 0.0
      %312 = vmatprep.subr.mxu0 0.0
      %313 = vmatpush1.msra.mxu0 0.0
      %314 = vmatprep.subr.mxu0 0.0
      %315 = vmatpush1.msra.mxu0 0.0
      %316 = vmatprep.subr.mxu0 0.0
      %317 = vmatpush1.msra.mxu0 0.0
      %318 = vmatprep.subr.mxu0 0.0
      %319 = vmatpush1.msra.mxu0 0.0
      %320 = vmatprep.subr.mxu0 0.0
      %321 = vmatpush1.msra.mxu0 0.0
      %322 = vmatprep.subr.mxu0 0.0
      %323 = vmatpush1.msra.mxu0 0.0
      %324 = vmatprep.subr.mxu0 0.0
      %325 = vmatpush1.msra.mxu0 0.0
      %326 = vmatprep.subr.mxu0 0.0
      %327 = vmatpush1.msra.mxu0 0.0
      %328 = vmatprep.subr.mxu0 0.0
      %329 = vmatpush1.msra.mxu0 0.0
      %330 = vmatprep.subr.mxu0 0.0
      %331 = vmatpush1.msra.mxu0 0.0
      %332 = vmatprep.subr.mxu0 0.0
      %333 = vmatpush1.msra.mxu0 0.0
      %334 = vmatprep.subr.mxu0 0.0
      %335 = vmatpush1.msra.mxu0 0.0
      %336 = vmatprep.subr.mxu0 0.0
      %337 = vmatpush1.msra.mxu0 0.0
      %338 = vmatprep.subr.mxu0 0.0
      %339 = vmatpush1.msra.mxu0 0.0
      %340 = vmatprep.subr.mxu0 0.0
      %341 = vmatpush1.msra.mxu0 0.0
      %342 = vmatprep.subr.mxu0 0.0
      %343 = vmatpush1.msra.mxu0 0.0
      %344 = vmatprep.subr.mxu0 0.0
      %345 = vmatpush1.msra.mxu0 0.0
      %346 = vmatprep.subr.mxu0 0.0
      %347 = vmatpush1.msra.mxu0 0.0
      %348 = vmatprep.subr.mxu0 0.0
      %349 = vmatpush1.msra.mxu0 0.0
      %350 = vmatprep.subr.mxu0 0.0
      %351 = vmatpush1.msra.mxu0 0.0
      %352 = vmatprep.subr.mxu0 0.0
      %353 = vmatpush1.msra.mxu0 0.0
      %354 = vmatprep.subr.mxu0 0.0
      %355 = vmatpush1.msra.mxu0 0.0
      %356 = vmatprep.subr.mxu0 0.0
      %357 = vmatpush1.msra.mxu0 0.0
      %358 = vmatprep.subr.mxu0 0.0
      %359 = vmatpush1.msra.mxu0 0.0
      %360 = vmatprep.subr.mxu0 0.0
      %361 = vmatpush1.msra.mxu0 0.0
      %362 = vmatprep.subr.mxu0 0.0
      %363 = vmatpush1.msra.mxu0 0.0
      %364 = vmatprep.subr.mxu0 0.0
      %365 = vmatpush1.msra.mxu0 0.0
      %366 = vmatprep.subr.mxu0 0.0
      %367 = vmatpush1.msra.mxu0 0.0
      %368 = vmatprep.mubr.f32.mxu0 0.0
      %369 = vmatmul.mubr.f32.gmra.mrb[0].mxu0 %v297
      %v370 = vpop.f32.mrb[0].mxu0
      %v371 = vadd.f32 0.0, %v370
      %v372 = vpop.f32.mrb[0].mxu0
      %v373 = vadd.f32 0.0, %v372
      %374 = vdwg.mxu0
      %v377 = vcombine.high %v278, %v278
      %378 = vrot.lane.b32.xlu0 %v278, 17
      %v379 = vpop.permute.xlu0 %378
      %380 = vrot.lane.b32.xlu0 %v377, 17
      %v381 = vpop.permute.xlu0 %380
      %382 = vrot.lane.b32.xlu0 %v279, 17
      %v383 = vpop.permute.xlu0 %382
      %vm384 = vcmask 138240
      %v385 = vsel %vm384, %v379, %v381
      %v386 = vsel %vm384, %v381, %v383
      %v388 = vsel %vm295, %v280, 0
      %v390 = vsel %vm299, %v385, 0
      %v392 = vsel %vm299, %v386, 0
      %394 = vmatprep.subr.mxu0 %v392
      %395 = vmatpush1.msra.mxu0 %v390
      %396 = vmatprep.subr.mxu0 0.0
      %397 = vmatpush1.msra.mxu0 0.0
      %398 = vmatprep.subr.mxu0 0.0
      %399 = vmatpush1.msra.mxu0 0.0
      %400 = vmatprep.subr.mxu0 0.0
      %401 = vmatpush1.msra.mxu0 0.0
      %402 = vmatprep.subr.mxu0 0.0
      %403 = vmatpush1.msra.mxu0 0.0
      %404 = vmatprep.subr.mxu0 0.0
      %405 = vmatpush1.msra.mxu0 0.0
      %406 = vmatprep.subr.mxu0 0.0
      %407 = vmatpush1.msra.mxu0 0.0
      %408 = vmatprep.subr.mxu0 0.0
      %409 = vmatpush1.msra.mxu0 0.0
      %410 = vmatprep.subr.mxu0 0.0
      %411 = vmatpush1.msra.mxu0 0.0
      %412 = vmatprep.subr.mxu0 0.0
      %413 = vmatpush1.msra.mxu0 0.0
      %414 = vmatprep.subr.mxu0 0.0
      %415 = vmatpush1.msra.mxu0 0.0
      %416 = vmatprep.subr.mxu0 0.0
      %417 = vmatpush1.msra.mxu0 0.0
      %418 = vmatprep.subr.mxu0 0.0
      %419 = vmatpush1.msra.mxu0 0.0
      %420 = vmatprep.subr.mxu0 0.0
      %421 = vmatpush1.msra.mxu0 0.0
      %422 = vmatprep.subr.mxu0 0.0
      %423 = vmatpush1.msra.mxu0 0.0
      %424 = vmatprep.subr.mxu0 0.0
      %425 = vmatpush1.msra.mxu0 0.0
      %426 = vmatprep.subr.mxu0 0.0
      %427 = vmatpush1.msra.mxu0 0.0
      %428 = vmatprep.subr.mxu0 0.0
      %429 = vmatpush1.msra.mxu0 0.0
      %430 = vmatprep.subr.mxu0 0.0
      %431 = vmatpush1.msra.mxu0 0.0
      %432 = vmatprep.subr.mxu0 0.0
      %433 = vmatpush1.msra.mxu0 0.0
      %434 = vmatprep.subr.mxu0 0.0
      %435 = vmatpush1.msra.mxu0 0.0
      %436 = vmatprep.subr.mxu0 0.0
      %437 = vmatpush1.msra.mxu0 0.0
      %438 = vmatprep.subr.mxu0 0.0
      %439 = vmatpush1.msra.mxu0 0.0
      %440 = vmatprep.subr.mxu0 0.0
      %441 = vmatpush1.msra.mxu0 0.0
      %442 = vmatprep.subr.mxu0 0.0
      %443 = vmatpush1.msra.mxu0 0.0
      %444 = vmatprep.subr.mxu0 0.0
      %445 = vmatpush1.msra.mxu0 0.0
      %446 = vmatprep.subr.mxu0 0.0
      %447 = vmatpush1.msra.mxu0 0.0
      %448 = vmatprep.subr.mxu0 0.0
      %449 = vmatpush1.msra.mxu0 0.0
      %450 = vmatprep.subr.mxu0 0.0
      %451 = vmatpush1.msra.mxu0 0.0
      %452 = vmatprep.subr.mxu0 0.0
      %453 = vmatpush1.msra.mxu0 0.0
      %454 = vmatprep.subr.mxu0 0.0
      %455 = vmatpush1.msra.mxu0 0.0
      %456 = vmatprep.subr.mxu0 0.0
      %457 = vmatpush1.msra.mxu0 0.0
      %458 = vmatprep.mubr.f32.mxu0 0.0
      %459 = vmatmul.mubr.f32.gmra.mrb[0].mxu0 %v388
      %v460 = vpop.f32.mrb[0].mxu0
      %v461 = vadd.f32 %v371, %v460
      %v462 = vpop.f32.mrb[0].mxu0
      %v463 = vadd.f32 %v373, %v462
      %464 = vdwg.mxu0
      %v465 = vld [vmem:[#allocation2] sm:$0xff]
      %v466 = vld [vmem:[#allocation2 + $0x8] sm:$0xf]
      %v468 = vlaneseq
      %v469 = vshrl.u32 %v468, 7
      %v470 = vsub.s32 0, %v469
      %v471 = vrot.slane %v254, %v470
      %v472 = vlaneseq
      %v473 = vshrl.u32 %v472, 7
      %v474 = vsub.s32 1, %v473
      %v475 = vrot.slane %v254, %v474
      %v476 = vcombine.low %v471, %v475
      %477 = vrot.lane.b32.xlu0 %v476, 113
      %v478 = vpop.permute.xlu0 %477
      %v479 = vrot.slane %v478, 4
      %vm480 = vcmask 924672
      %v481 = vsel %vm480, %v479, %v478
      %v484 = vmul.f32 %v465, %v481
      %v485 = vmul.f32 %v466, %v479
      %s486 = scalar_lea.vmem %s1, 16
      %v487 = vld [vmem:[%s486] sm:$0xff]
      %v490 = vcombine.high %v484, %v484
      %491 = vrot.lane.b32.xlu0 %v484, 15
      %v492 = vpop.permute.xlu0 %491
      %493 = vrot.lane.b32.xlu0 %v490, 15
      %v494 = vpop.permute.xlu0 %493
      %495 = vrot.lane.b32.xlu0 %v485, 15
      %v496 = vpop.permute.xlu0 %495
      %vm497 = vcmask 121856
      %v498 = vsel %vm497, %v492, %v494
      %v499 = vsel %vm497, %v494, %v496
      %v501 = vsel %vm295, %v487, 0
      %v503 = vsel %vm299, %v498, 0
      %v505 = vsel %vm299, %v499, 0
      %507 = vmatprep.subr.mxu0 %v505
      %508 = vmatpush1.msra.mxu0 %v503
      %509 = vmatprep.subr.mxu0 0.0
      %510 = vmatpush1.msra.mxu0 0.0
      %511 = vmatprep.subr.mxu0 0.0
      %512 = vmatpush1.msra.mxu0 0.0
      %513 = vmatprep.subr.mxu0 0.0
      %514 = vmatpush1.msra.mxu0 0.0
      %515 = vmatprep.subr.mxu0 0.0
      %516 = vmatpush1.msra.mxu0 0.0
      %517 = vmatprep.subr.mxu0 0.0
      %518 = vmatpush1.msra.mxu0 0.0
      %519 = vmatprep.subr.mxu0 0.0
      %520 = vmatpush1.msra.mxu0 0.0
      %521 = vmatprep.subr.mxu0 0.0
      %522 = vmatpush1.msra.mxu0 0.0
      %523 = vmatprep.subr.mxu0 0.0
      %524 = vmatpush1.msra.mxu0 0.0
      %525 = vmatprep.subr.mxu0 0.0
      %526 = vmatpush1.msra.mxu0 0.0
      %527 = vmatprep.subr.mxu0 0.0
      %528 = vmatpush1.msra.mxu0 0.0
      %529 = vmatprep.subr.mxu0 0.0
      %530 = vmatpush1.msra.mxu0 0.0
      %531 = vmatprep.subr.mxu0 0.0
      %532 = vmatpush1.msra.mxu0 0.0
      %533 = vmatprep.subr.mxu0 0.0
      %534 = vmatpush1.msra.mxu0 0.0
      %535 = vmatprep.subr.mxu0 0.0
      %536 = vmatpush1.msra.mxu0 0.0
      %537 = vmatprep.subr.mxu0 0.0
      %538 = vmatpush1.msra.mxu0 0.0
      %539 = vmatprep.subr.mxu0 0.0
      %540 = vmatpush1.msra.mxu0 0.0
      %541 = vmatprep.subr.mxu0 0.0
      %542 = vmatpush1.msra.mxu0 0.0
      %543 = vmatprep.subr.mxu0 0.0
      %544 = vmatpush1.msra.mxu0 0.0
      %545 = vmatprep.subr.mxu0 0.0
      %546 = vmatpush1.msra.mxu0 0.0
      %547 = vmatprep.subr.mxu0 0.0
      %548 = vmatpush1.msra.mxu0 0.0
      %549 = vmatprep.subr.mxu0 0.0
      %550 = vmatpush1.msra.mxu0 0.0
      %551 = vmatprep.subr.mxu0 0.0
      %552 = vmatpush1.msra.mxu0 0.0
      %553 = vmatprep.subr.mxu0 0.0
      %554 = vmatpush1.msra.mxu0 0.0
      %555 = vmatprep.subr.mxu0 0.0
      %556 = vmatpush1.msra.mxu0 0.0
      %557 = vmatprep.subr.mxu0 0.0
      %558 = vmatpush1.msra.mxu0 0.0
      %559 = vmatprep.subr.mxu0 0.0
      %560 = vmatpush1.msra.mxu0 0.0
      %561 = vmatprep.subr.mxu0 0.0
      %562 = vmatpush1.msra.mxu0 0.0
      %563 = vmatprep.subr.mxu0 0.0
      %564 = vmatpush1.msra.mxu0 0.0
      %565 = vmatprep.subr.mxu0 0.0
      %566 = vmatpush1.msra.mxu0 0.0
      %567 = vmatprep.subr.mxu0 0.0
      %568 = vmatpush1.msra.mxu0 0.0
      %569 = vmatprep.subr.mxu0 0.0
      %570 = vmatpush1.msra.mxu0 0.0
      %571 = vmatprep.mubr.f32.mxu0 0.0
      %572 = vmatmul.mubr.f32.gmra.mrb[0].mxu0 %v501
      %v573 = vpop.f32.mrb[0].mxu0
      %v574 = vadd.f32 0.0, %v573
      %v575 = vpop.f32.mrb[0].mxu0
      %v576 = vadd.f32 0.0, %v575
      %577 = vdwg.mxu0
      %v578 = vadd.f32 %v461, %v574
      %v579 = vadd.f32 %v463, %v576
      %v580 = vld [vmem:[#allocation2] sm:$0xff]
      %v581 = vld [vmem:[#allocation2 + $0x8] sm:$0xf]
      %582 = vrot.lane.b32.xlu0 %v270, 127
      %v583 = vpop.permute.xlu0 %582
      %v584 = vrot.slane %v583, 4
      %vm585 = vcmask 1039360
      %v586 = vsel %vm585, %v584, %v583
      %v589 = vmul.f32 %v580, %v586
      %v590 = vmul.f32 %v581, %v584
      %s591 = scalar_lea.vmem %s1, 24
      %v592 = vld [vmem:[%s591] sm:$0xff]
      %v595 = vcombine.high %v589, %v589
      %596 = vrot.lane.b32.xlu0 %v589, 1
      %v597 = vpop.permute.xlu0 %596
      %598 = vrot.lane.b32.xlu0 %v595, 1
      %v599 = vpop.permute.xlu0 %598
      %600 = vrot.lane.b32.xlu0 %v590, 1
      %v601 = vpop.permute.xlu0 %600
      %vm602 = vcmask 7168
      %v603 = vsel %vm602, %v597, %v599
      %v604 = vsel %vm602, %v599, %v601
      %v606 = vsel %vm295, %v592, 0
      %v608 = vsel %vm299, %v603, 0
      %v610 = vsel %vm299, %v604, 0
      %612 = vmatprep.subr.mxu0 %v610
      %613 = vmatpush1.msra.mxu0 %v608
      %614 = vmatprep.subr.mxu0 0.0
      %615 = vmatpush1.msra.mxu0 0.0
      %616 = vmatprep.subr.mxu0 0.0
      %617 = vmatpush1.msra.mxu0 0.0
      %618 = vmatprep.subr.mxu0 0.0
      %619 = vmatpush1.msra.mxu0 0.0
      %620 = vmatprep.subr.mxu0 0.0
      %621 = vmatpush1.msra.mxu0 0.0
      %622 = vmatprep.subr.mxu0 0.0
      %623 = vmatpush1.msra.mxu0 0.0
      %624 = vmatprep.subr.mxu0 0.0
      %625 = vmatpush1.msra.mxu0 0.0
      %626 = vmatprep.subr.mxu0 0.0
      %627 = vmatpush1.msra.mxu0 0.0
      %628 = vmatprep.subr.mxu0 0.0
      %629 = vmatpush1.msra.mxu0 0.0
      %630 = vmatprep.subr.mxu0 0.0
      %631 = vmatpush1.msra.mxu0 0.0
      %632 = vmatprep.subr.mxu0 0.0
      %633 = vmatpush1.msra.mxu0 0.0
      %634 = vmatprep.subr.mxu0 0.0
      %635 = vmatpush1.msra.mxu0 0.0
      %636 = vmatprep.subr.mxu0 0.0
      %637 = vmatpush1.msra.mxu0 0.0
      %638 = vmatprep.subr.mxu0 0.0
      %639 = vmatpush1.msra.mxu0 0.0
      %640 = vmatprep.subr.mxu0 0.0
      %641 = vmatpush1.msra.mxu0 0.0
      %642 = vmatprep.subr.mxu0 0.0
      %643 = vmatpush1.msra.mxu0 0.0
      %644 = vmatprep.subr.mxu0 0.0
      %645 = vmatpush1.msra.mxu0 0.0
      %646 = vmatprep.subr.mxu0 0.0
      %647 = vmatpush1.msra.mxu0 0.0
      %648 = vmatprep.subr.mxu0 0.0
      %649 = vmatpush1.msra.mxu0 0.0
      %650 = vmatprep.subr.mxu0 0.0
      %651 = vmatpush1.msra.mxu0 0.0
      %652 = vmatprep.subr.mxu0 0.0
      %653 = vmatpush1.msra.mxu0 0.0
      %654 = vmatprep.subr.mxu0 0.0
      %655 = vmatpush1.msra.mxu0 0.0
      %656 = vmatprep.subr.mxu0 0.0
      %657 = vmatpush1.msra.mxu0 0.0
      %658 = vmatprep.subr.mxu0 0.0
      %659 = vmatpush1.msra.mxu0 0.0
      %660 = vmatprep.subr.mxu0 0.0
      %661 = vmatpush1.msra.mxu0 0.0
      %662 = vmatprep.subr.mxu0 0.0
      %663 = vmatpush1.msra.mxu0 0.0
      %664 = vmatprep.subr.mxu0 0.0
      %665 = vmatpush1.msra.mxu0 0.0
      %666 = vmatprep.subr.mxu0 0.0
      %667 = vmatpush1.msra.mxu0 0.0
      %668 = vmatprep.subr.mxu0 0.0
      %669 = vmatpush1.msra.mxu0 0.0
      %670 = vmatprep.subr.mxu0 0.0
      %671 = vmatpush1.msra.mxu0 0.0
      %672 = vmatprep.subr.mxu0 0.0
      %673 = vmatpush1.msra.mxu0 0.0
      %674 = vmatprep.subr.mxu0 0.0
      %675 = vmatpush1.msra.mxu0 0.0
      %676 = vmatprep.mubr.f32.mxu0 0.0
      %677 = vmatmul.mubr.f32.gmra.mrb[0].mxu0 %v606
      %v678 = vpop.f32.mrb[0].mxu0
      %v679 = vadd.f32 0.0, %v678
      %v680 = vpop.f32.mrb[0].mxu0
      %v681 = vadd.f32 0.0, %v680
      %682 = vdwg.mxu0
      %v683 = vadd.f32 %v578, %v679
      %v684 = vadd.f32 %v579, %v681
      %v685 = vld [vmem:[#allocation2 + $0x4] sm:$0xff]
      %s686 = scalar_lea.vmem %s1, 32
      %v687 = vld [vmem:[%s686] sm:$0xff]
      %v689 = vcombine.high %v685, %v685
      %v691 = vsel %vm295, %v687, 0
      %v693 = vsel %vm299, %v685, 0
      %v695 = vsel %vm299, %v689, 0
      %697 = vmatprep.subr.mxu0 %v695
      %698 = vmatpush1.msra.mxu0 %v693
      %699 = vmatprep.subr.mxu0 0.0
      %700 = vmatpush1.msra.mxu0 0.0
      %701 = vmatprep.subr.mxu0 0.0
      %702 = vmatpush1.msra.mxu0 0.0
      %703 = vmatprep.subr.mxu0 0.0
      %704 = vmatpush1.msra.mxu0 0.0
      %705 = vmatprep.subr.mxu0 0.0
      %706 = vmatpush1.msra.mxu0 0.0
      %707 = vmatprep.subr.mxu0 0.0
      %708 = vmatpush1.msra.mxu0 0.0
      %709 = vmatprep.subr.mxu0 0.0
      %710 = vmatpush1.msra.mxu0 0.0
      %711 = vmatprep.subr.mxu0 0.0
      %712 = vmatpush1.msra.mxu0 0.0
      %713 = vmatprep.subr.mxu0 0.0
      %714 = vmatpush1.msra.mxu0 0.0
      %715 = vmatprep.subr.mxu0 0.0
      %716 = vmatpush1.msra.mxu0 0.0
      %717 = vmatprep.subr.mxu0 0.0
      %718 = vmatpush1.msra.mxu0 0.0
      %719 = vmatprep.subr.mxu0 0.0
      %720 = vmatpush1.msra.mxu0 0.0
      %721 = vmatprep.subr.mxu0 0.0
      %722 = vmatpush1.msra.mxu0 0.0
      %723 = vmatprep.subr.mxu0 0.0
      %724 = vmatpush1.msra.mxu0 0.0
      %725 = vmatprep.subr.mxu0 0.0
      %726 = vmatpush1.msra.mxu0 0.0
      %727 = vmatprep.subr.mxu0 0.0
      %728 = vmatpush1.msra.mxu0 0.0
      %729 = vmatprep.subr.mxu0 0.0
      %730 = vmatpush1.msra.mxu0 0.0
      %731 = vmatprep.subr.mxu0 0.0
      %732 = vmatpush1.msra.mxu0 0.0
      %733 = vmatprep.subr.mxu0 0.0
      %734 = vmatpush1.msra.mxu0 0.0
      %735 = vmatprep.subr.mxu0 0.0
      %736 = vmatpush1.msra.mxu0 0.0
      %737 = vmatprep.subr.mxu0 0.0
      %738 = vmatpush1.msra.mxu0 0.0
      %739 = vmatprep.subr.mxu0 0.0
      %740 = vmatpush1.msra.mxu0 0.0
      %741 = vmatprep.subr.mxu0 0.0
      %742 = vmatpush1.msra.mxu0 0.0
      %743 = vmatprep.subr.mxu0 0.0
      %744 = vmatpush1.msra.mxu0 0.0
      %745 = vmatprep.subr.mxu0 0.0
      %746 = vmatpush1.msra.mxu0 0.0
      %747 = vmatprep.subr.mxu0 0.0
      %748 = vmatpush1.msra.mxu0 0.0
      %749 = vmatprep.subr.mxu0 0.0
      %750 = vmatpush1.msra.mxu0 0.0
      %751 = vmatprep.subr.mxu0 0.0
      %752 = vmatpush1.msra.mxu0 0.0
      %753 = vmatprep.subr.mxu0 0.0
      %754 = vmatpush1.msra.mxu0 0.0
      %755 = vmatprep.subr.mxu0 0.0
      %756 = vmatpush1.msra.mxu0 0.0
      %757 = vmatprep.subr.mxu0 0.0
      %758 = vmatpush1.msra.mxu0 0.0
      %759 = vmatprep.subr.mxu0 0.0
      %760 = vmatpush1.msra.mxu0 0.0
      %761 = vmatprep.mubr.f32.mxu0 0.0
      %762 = vmatmul.mubr.f32.gmra.mrb[0].mxu0 %v691
      %v763 = vpop.f32.mrb[0].mxu0
      %v764 = vadd.f32 0.0, %v763
      %v765 = vpop.f32.mrb[0].mxu0
      %v766 = vadd.f32 0.0, %v765
      %767 = vdwg.mxu0
      %v768 = vadd.f32 %v683, %v764
      %v769 = vadd.f32 %v684, %v766
      %v770 = vld [vmem:[#allocation2 + $0x4] sm:$0xff]
      %v771 = vld [vmem:[#allocation2 + $0xc] sm:$0xf]
      %772 = vrot.lane.b32.xlu0 %v476, 1
      %v773 = vpop.permute.xlu0 %772
      %v774 = vrot.slane %v773, 4
      %v775 = vsel %vm602, %v774, %v773
      %v778 = vmul.f32 %v770, %v775
      %v779 = vmul.f32 %v771, %v774
      %s780 = scalar_lea.vmem %s1, 40
      %v781 = vld [vmem:[%s780] sm:$0xff]
      %v784 = vcombine.high %v778, %v778
      %785 = vrot.lane.b32.xlu0 %v778, 127
      %v786 = vpop.permute.xlu0 %785
      %787 = vrot.lane.b32.xlu0 %v784, 127
      %v788 = vpop.permute.xlu0 %787
      %789 = vrot.lane.b32.xlu0 %v779, 127
      %v790 = vpop.permute.xlu0 %789
      %v791 = vsel %vm585, %v786, %v788
      %v792 = vsel %vm585, %v788, %v790
      %v794 = vsel %vm295, %v781, 0
      %v796 = vsel %vm299, %v791, 0
      %v798 = vsel %vm299, %v792, 0
      %800 = vmatprep.subr.mxu0 %v798
      %801 = vmatpush1.msra.mxu0 %v796
      %802 = vmatprep.subr.mxu0 0.0
      %803 = vmatpush1.msra.mxu0 0.0
      %804 = vmatprep.subr.mxu0 0.0
      %805 = vmatpush1.msra.mxu0 0.0
      %806 = vmatprep.subr.mxu0 0.0
      %807 = vmatpush1.msra.mxu0 0.0
      %808 = vmatprep.subr.mxu0 0.0
      %809 = vmatpush1.msra.mxu0 0.0
      %810 = vmatprep.subr.mxu0 0.0
      %811 = vmatpush1.msra.mxu0 0.0
      %812 = vmatprep.subr.mxu0 0.0
      %813 = vmatpush1.msra.mxu0 0.0
      %814 = vmatprep.subr.mxu0 0.0
      %815 = vmatpush1.msra.mxu0 0.0
      %816 = vmatprep.subr.mxu0 0.0
      %817 = vmatpush1.msra.mxu0 0.0
      %818 = vmatprep.subr.mxu0 0.0
      %819 = vmatpush1.msra.mxu0 0.0
      %820 = vmatprep.subr.mxu0 0.0
      %821 = vmatpush1.msra.mxu0 0.0
      %822 = vmatprep.subr.mxu0 0.0
      %823 = vmatpush1.msra.mxu0 0.0
      %824 = vmatprep.subr.mxu0 0.0
      %825 = vmatpush1.msra.mxu0 0.0
      %826 = vmatprep.subr.mxu0 0.0
      %827 = vmatpush1.msra.mxu0 0.0
      %828 = vmatprep.subr.mxu0 0.0
      %829 = vmatpush1.msra.mxu0 0.0
      %830 = vmatprep.subr.mxu0 0.0
      %831 = vmatpush1.msra.mxu0 0.0
      %832 = vmatprep.subr.mxu0 0.0
      %833 = vmatpush1.msra.mxu0 0.0
      %834 = vmatprep.subr.mxu0 0.0
      %835 = vmatpush1.msra.mxu0 0.0
      %836 = vmatprep.subr.mxu0 0.0
      %837 = vmatpush1.msra.mxu0 0.0
      %838 = vmatprep.subr.mxu0 0.0
      %839 = vmatpush1.msra.mxu0 0.0
      %840 = vmatprep.subr.mxu0 0.0
      %841 = vmatpush1.msra.mxu0 0.0
      %842 = vmatprep.subr.mxu0 0.0
      %843 = vmatpush1.msra.mxu0 0.0
      %844 = vmatprep.subr.mxu0 0.0
      %845 = vmatpush1.msra.mxu0 0.0
      %846 = vmatprep.subr.mxu0 0.0
      %847 = vmatpush1.msra.mxu0 0.0
      %848 = vmatprep.subr.mxu0 0.0
      %849 = vmatpush1.msra.mxu0 0.0
      %850 = vmatprep.subr.mxu0 0.0
      %851 = vmatpush1.msra.mxu0 0.0
      %852 = vmatprep.subr.mxu0 0.0
      %853 = vmatpush1.msra.mxu0 0.0
      %854 = vmatprep.subr.mxu0 0.0
      %855 = vmatpush1.msra.mxu0 0.0
      %856 = vmatprep.subr.mxu0 0.0
      %857 = vmatpush1.msra.mxu0 0.0
      %858 = vmatprep.subr.mxu0 0.0
      %859 = vmatpush1.msra.mxu0 0.0
      %860 = vmatprep.subr.mxu0 0.0
      %861 = vmatpush1.msra.mxu0 0.0
      %862 = vmatprep.subr.mxu0 0.0
      %863 = vmatpush1.msra.mxu0 0.0
      %864 = vmatprep.mubr.f32.mxu0 0.0
      %865 = vmatmul.mubr.f32.gmra.mrb[0].mxu0 %v794
      %v866 = vpop.f32.mrb[0].mxu0
      %v867 = vadd.f32 0.0, %v866
      %v868 = vpop.f32.mrb[0].mxu0
      %v869 = vadd.f32 0.0, %v868
      %870 = vdwg.mxu0
      %v871 = vadd.f32 %v768, %v867
      %v872 = vadd.f32 %v769, %v869
      %v873 = vld [vmem:[#allocation2 + $0x4] sm:$0xff]
      %v874 = vld [vmem:[#allocation2 + $0xc] sm:$0xf]
      %875 = vrot.lane.b32.xlu0 %v270, 15
      %v876 = vpop.permute.xlu0 %875
      %v877 = vrot.slane %v876, 4
      %v878 = vsel %vm497, %v877, %v876
      %v881 = vmul.f32 %v873, %v878
      %v882 = vmul.f32 %v874, %v877
      %s883 = scalar_lea.vmem %s1, 48
      %v884 = vld [vmem:[%s883] sm:$0xff]
      %v887 = vcombine.high %v881, %v881
      %888 = vrot.lane.b32.xlu0 %v881, 113
      %v889 = vpop.permute.xlu0 %888
      %890 = vrot.lane.b32.xlu0 %v887, 113
      %v891 = vpop.permute.xlu0 %890
      %892 = vrot.lane.b32.xlu0 %v882, 113
      %v893 = vpop.permute.xlu0 %892
      %v894 = vsel %vm480, %v889, %v891
      %v895 = vsel %vm480, %v891, %v893
      %v897 = vsel %vm295, %v884, 0
      %v899 = vsel %vm299, %v894, 0
      %v901 = vsel %vm299, %v895, 0
      %903 = vmatprep.subr.mxu0 %v901
      %904 = vmatpush1.msra.mxu0 %v899
      %905 = vmatprep.subr.mxu0 0.0
      %906 = vmatpush1.msra.mxu0 0.0
      %907 = vmatprep.subr.mxu0 0.0
      %908 = vmatpush1.msra.mxu0 0.0
      %909 = vmatprep.subr.mxu0 0.0
      %910 = vmatpush1.msra.mxu0 0.0
      %911 = vmatprep.subr.mxu0 0.0
      %912 = vmatpush1.msra.mxu0 0.0
      %913 = vmatprep.subr.mxu0 0.0
      %914 = vmatpush1.msra.mxu0 0.0
      %915 = vmatprep.subr.mxu0 0.0
      %916 = vmatpush1.msra.mxu0 0.0
      %917 = vmatprep.subr.mxu0 0.0
      %918 = vmatpush1.msra.mxu0 0.0
      %919 = vmatprep.subr.mxu0 0.0
      %920 = vmatpush1.msra.mxu0 0.0
      %921 = vmatprep.subr.mxu0 0.0
      %922 = vmatpush1.msra.mxu0 0.0
      %923 = vmatprep.subr.mxu0 0.0
      %924 = vmatpush1.msra.mxu0 0.0
      %925 = vmatprep.subr.mxu0 0.0
      %926 = vmatpush1.msra.mxu0 0.0
      %927 = vmatprep.subr.mxu0 0.0
      %928 = vmatpush1.msra.mxu0 0.0
      %929 = vmatprep.subr.mxu0 0.0
      %930 = vmatpush1.msra.mxu0 0.0
      %931 = vmatprep.subr.mxu0 0.0
      %932 = vmatpush1.msra.mxu0 0.0
      %933 = vmatprep.subr.mxu0 0.0
      %934 = vmatpush1.msra.mxu0 0.0
      %935 = vmatprep.subr.mxu0 0.0
      %936 = vmatpush1.msra.mxu0 0.0
      %937 = vmatprep.subr.mxu0 0.0
      %938 = vmatpush1.msra.mxu0 0.0
      %939 = vmatprep.subr.mxu0 0.0
      %940 = vmatpush1.msra.mxu0 0.0
      %941 = vmatprep.subr.mxu0 0.0
      %942 = vmatpush1.msra.mxu0 0.0
      %943 = vmatprep.subr.mxu0 0.0
      %944 = vmatpush1.msra.mxu0 0.0
      %945 = vmatprep.subr.mxu0 0.0
      %946 = vmatpush1.msra.mxu0 0.0
      %947 = vmatprep.subr.mxu0 0.0
      %948 = vmatpush1.msra.mxu0 0.0
      %949 = vmatprep.subr.mxu0 0.0
      %950 = vmatpush1.msra.mxu0 0.0
      %951 = vmatprep.subr.mxu0 0.0
      %952 = vmatpush1.msra.mxu0 0.0
      %953 = vmatprep.subr.mxu0 0.0
      %954 = vmatpush1.msra.mxu0 0.0
      %955 = vmatprep.subr.mxu0 0.0
      %956 = vmatpush1.msra.mxu0 0.0
      %957 = vmatprep.subr.mxu0 0.0
      %958 = vmatpush1.msra.mxu0 0.0
      %959 = vmatprep.subr.mxu0 0.0
      %960 = vmatpush1.msra.mxu0 0.0
      %961 = vmatprep.subr.mxu0 0.0
      %962 = vmatpush1.msra.mxu0 0.0
      %963 = vmatprep.subr.mxu0 0.0
      %964 = vmatpush1.msra.mxu0 0.0
      %965 = vmatprep.subr.mxu0 0.0
      %966 = vmatpush1.msra.mxu0 0.0
      %967 = vmatprep.mubr.f32.mxu0 0.0
      %968 = vmatmul.mubr.f32.gmra.mrb[0].mxu0 %v897
      %v969 = vpop.f32.mrb[0].mxu0
      %v970 = vadd.f32 0.0, %v969
      %v971 = vpop.f32.mrb[0].mxu0
      %v972 = vadd.f32 0.0, %v971
      %973 = vdwg.mxu0
      %v974 = vadd.f32 %v871, %v970
      %v975 = vadd.f32 %v872, %v972
      %v976 = vld [vmem:[#allocation2 + $0x4] sm:$0xff]
      %v977 = vld [vmem:[#allocation2 + $0xc] sm:$0xf]
      %s978 = scalar_lea.vmem %s1, 56
      %v979 = vld [vmem:[%s978] sm:$0xff]
      %v982 = vcombine.high %v976, %v976
      %983 = vrot.lane.b32.xlu0 %v976, 112
      %v984 = vpop.permute.xlu0 %983
      %985 = vrot.lane.b32.xlu0 %v982, 112
      %v986 = vpop.permute.xlu0 %985
      %987 = vrot.lane.b32.xlu0 %v977, 112
      %v988 = vpop.permute.xlu0 %987
      %vm989 = vcmask 916480
      %v990 = vsel %vm989, %v984, %v986
      %v991 = vsel %vm989, %v986, %v988
      %v993 = vsel %vm295, %v979, 0
      %v995 = vsel %vm299, %v990, 0
      %v997 = vsel %vm299, %v991, 0
      %999 = vmatprep.subr.mxu0 %v997
      %1000 = vmatpush1.msra.mxu0 %v995
      %1001 = vmatprep.subr.mxu0 0.0
      %1002 = vmatpush1.msra.mxu0 0.0
      %1003 = vmatprep.subr.mxu0 0.0
      %1004 = vmatpush1.msra.mxu0 0.0
      %1005 = vmatprep.subr.mxu0 0.0
      %1006 = vmatpush1.msra.mxu0 0.0
      %1007 = vmatprep.subr.mxu0 0.0
      %1008 = vmatpush1.msra.mxu0 0.0
      %1009 = vmatprep.subr.mxu0 0.0
      %1010 = vmatpush1.msra.mxu0 0.0
      %1011 = vmatprep.subr.mxu0 0.0
      %1012 = vmatpush1.msra.mxu0 0.0
      %1013 = vmatprep.subr.mxu0 0.0
      %1014 = vmatpush1.msra.mxu0 0.0
      %1015 = vmatprep.subr.mxu0 0.0
      %1016 = vmatpush1.msra.mxu0 0.0
      %1017 = vmatprep.subr.mxu0 0.0
      %1018 = vmatpush1.msra.mxu0 0.0
      %1019 = vmatprep.subr.mxu0 0.0
      %1020 = vmatpush1.msra.mxu0 0.0
      %1021 = vmatprep.subr.mxu0 0.0
      %1022 = vmatpush1.msra.mxu0 0.0
      %1023 = vmatprep.subr.mxu0 0.0
      %1024 = vmatpush1.msra.mxu0 0.0
      %1025 = vmatprep.subr.mxu0 0.0
      %1026 = vmatpush1.msra.mxu0 0.0
      %1027 = vmatprep.subr.mxu0 0.0
      %1028 = vmatpush1.msra.mxu0 0.0
      %1029 = vmatprep.subr.mxu0 0.0
      %1030 = vmatpush1.msra.mxu0 0.0
      %1031 = vmatprep.subr.mxu0 0.0
      %1032 = vmatpush1.msra.mxu0 0.0
      %1033 = vmatprep.subr.mxu0 0.0
      %1034 = vmatpush1.msra.mxu0 0.0
      %1035 = vmatprep.subr.mxu0 0.0
      %1036 = vmatpush1.msra.mxu0 0.0
      %1037 = vmatprep.subr.mxu0 0.0
      %1038 = vmatpush1.msra.mxu0 0.0
      %1039 = vmatprep.subr.mxu0 0.0
      %1040 = vmatpush1.msra.mxu0 0.0
      %1041 = vmatprep.subr.mxu0 0.0
      %1042 = vmatpush1.msra.mxu0 0.0
      %1043 = vmatprep.subr.mxu0 0.0
      %1044 = vmatpush1.msra.mxu0 0.0
      %1045 = vmatprep.subr.mxu0 0.0
      %1046 = vmatpush1.msra.mxu0 0.0
      %1047 = vmatprep.subr.mxu0 0.0
      %1048 = vmatpush1.msra.mxu0 0.0
      %1049 = vmatprep.subr.mxu0 0.0
      %1050 = vmatpush1.msra.mxu0 0.0
      %1051 = vmatprep.subr.mxu0 0.0
      %1052 = vmatpush1.msra.mxu0 0.0
      %1053 = vmatprep.subr.mxu0 0.0
      %1054 = vmatpush1.msra.mxu0 0.0
      %1055 = vmatprep.subr.mxu0 0.0
      %1056 = vmatpush1.msra.mxu0 0.0
      %1057 = vmatprep.subr.mxu0 0.0
      %1058 = vmatpush1.msra.mxu0 0.0
      %1059 = vmatprep.subr.mxu0 0.0
      %1060 = vmatpush1.msra.mxu0 0.0
      %1061 = vmatprep.subr.mxu0 0.0
      %1062 = vmatpush1.msra.mxu0 0.0
      %1063 = vmatprep.mubr.f32.mxu0 0.0
      %1064 = vmatmul.mubr.f32.gmra.mrb[0].mxu0 %v993
      %v1065 = vpop.f32.mrb[0].mxu0
      %v1066 = vadd.f32 0.0, %v1065
      %v1067 = vpop.f32.mrb[0].mxu0
      %v1068 = vadd.f32 0.0, %v1067
      %1069 = vdwg.mxu0
      %v1070 = vadd.f32 %v974, %v1066
      %v1071 = vadd.f32 %v975, %v1068
      %v1072 = vld [vmem:[#allocation2 + $0x4] sm:$0xff]
      %v1073 = vld [vmem:[#allocation2 + $0xc] sm:$0xf]
      %1074 = vrot.lane.b32.xlu0 %v476, 17
      %v1075 = vpop.permute.xlu0 %1074
      %v1076 = vrot.slane %v1075, 4
      %v1077 = vsel %vm384, %v1076, %v1075
      %v1080 = vmul.f32 %v1072, %v1077
      %v1081 = vmul.f32 %v1073, %v1076
      %s1082 = scalar_lea.vmem %s1, 64
      %v1083 = vld [vmem:[%s1082] sm:$0xff]
      %v1086 = vcombine.high %v1080, %v1080
      %1087 = vrot.lane.b32.xlu0 %v1080, 111
      %v1088 = vpop.permute.xlu0 %1087
      %1089 = vrot.lane.b32.xlu0 %v1086, 111
      %v1090 = vpop.permute.xlu0 %1089
      %1091 = vrot.lane.b32.xlu0 %v1081, 111
      %v1092 = vpop.permute.xlu0 %1091
      %v1093 = vsel %vm274, %v1088, %v1090
      %v1094 = vsel %vm274, %v1090, %v1092
      %v1096 = vsel %vm295, %v1083, 0
      %v1098 = vsel %vm299, %v1093, 0
      %v1100 = vsel %vm299, %v1094, 0
      %1102 = vmatprep.subr.mxu0 %v1100
      %1103 = vmatpush1.msra.mxu0 %v1098
      %1104 = vmatprep.subr.mxu0 0.0
      %1105 = vmatpush1.msra.mxu0 0.0
      %1106 = vmatprep.subr.mxu0 0.0
      %1107 = vmatpush1.msra.mxu0 0.0
      %1108 = vmatprep.subr.mxu0 0.0
      %1109 = vmatpush1.msra.mxu0 0.0
      %1110 = vmatprep.subr.mxu0 0.0
      %1111 = vmatpush1.msra.mxu0 0.0
      %1112 = vmatprep.subr.mxu0 0.0
      %1113 = vmatpush1.msra.mxu0 0.0
      %1114 = vmatprep.subr.mxu0 0.0
      %1115 = vmatpush1.msra.mxu0 0.0
      %1116 = vmatprep.subr.mxu0 0.0
      %1117 = vmatpush1.msra.mxu0 0.0
      %1118 = vmatprep.subr.mxu0 0.0
      %1119 = vmatpush1.msra.mxu0 0.0
      %1120 = vmatprep.subr.mxu0 0.0
      %1121 = vmatpush1.msra.mxu0 0.0
      %1122 = vmatprep.subr.mxu0 0.0
      %1123 = vmatpush1.msra.mxu0 0.0
      %1124 = vmatprep.subr.mxu0 0.0
      %1125 = vmatpush1.msra.mxu0 0.0
      %1126 = vmatprep.subr.mxu0 0.0
      %1127 = vmatpush1.msra.mxu0 0.0
      %1128 = vmatprep.subr.mxu0 0.0
      %1129 = vmatpush1.msra.mxu0 0.0
      %1130 = vmatprep.subr.mxu0 0.0
      %1131 = vmatpush1.msra.mxu0 0.0
      %1132 = vmatprep.subr.mxu0 0.0
      %1133 = vmatpush1.msra.mxu0 0.0
      %1134 = vmatprep.subr.mxu0 0.0
      %1135 = vmatpush1.msra.mxu0 0.0
      %1136 = vmatprep.subr.mxu0 0.0
      %1137 = vmatpush1.msra.mxu0 0.0
      %1138 = vmatprep.subr.mxu0 0.0
      %1139 = vmatpush1.msra.mxu0 0.0
      %1140 = vmatprep.subr.mxu0 0.0
      %1141 = vmatpush1.msra.mxu0 0.0
      %1142 = vmatprep.subr.mxu0 0.0
      %1143 = vmatpush1.msra.mxu0 0.0
      %1144 = vmatprep.subr.mxu0 0.0
      %1145 = vmatpush1.msra.mxu0 0.0
      %1146 = vmatprep.subr.mxu0 0.0
      %1147 = vmatpush1.msra.mxu0 0.0
      %1148 = vmatprep.subr.mxu0 0.0
      %1149 = vmatpush1.msra.mxu0 0.0
      %1150 = vmatprep.subr.mxu0 0.0
      %1151 = vmatpush1.msra.mxu0 0.0
      %1152 = vmatprep.subr.mxu0 0.0
      %1153 = vmatpush1.msra.mxu0 0.0
      %1154 = vmatprep.subr.mxu0 0.0
      %1155 = vmatpush1.msra.mxu0 0.0
      %1156 = vmatprep.subr.mxu0 0.0
      %1157 = vmatpush1.msra.mxu0 0.0
      %1158 = vmatprep.subr.mxu0 0.0
      %1159 = vmatpush1.msra.mxu0 0.0
      %1160 = vmatprep.subr.mxu0 0.0
      %1161 = vmatpush1.msra.mxu0 0.0
      %1162 = vmatprep.subr.mxu0 0.0
      %1163 = vmatpush1.msra.mxu0 0.0
      %1164 = vmatprep.subr.mxu0 0.0
      %1165 = vmatpush1.msra.mxu0 0.0
      %1166 = vmatprep.mubr.f32.mxu0 0.0
      %1167 = vmatmul.mubr.f32.gmra.mrb[0].mxu0 %v1096
      %v1168 = vpop.f32.mrb[0].mxu0
      %v1169 = vadd.f32 0.0, %v1168
      %v1170 = vpop.f32.mrb[0].mxu0
      %v1171 = vadd.f32 0.0, %v1170
      %1172 = vdwg.mxu0
      %v1173 = vadd.f32 %v1070, %v1169
      %v1174 = vadd.f32 %v1071, %v1171
      %v1175 = vld [vmem:[%s2] sm:$0xff]
      %1177 = vset.pattern.permute.xlu0 0
      %1178 = vperm.xlu0 %1177, %v1175
      %v1179 = vpop.permute.xlu0 %1178
      %v1181 = vadd.f32 %v1173, %v1179
      %v1182 = vadd.f32 %v1174, %v1179
      %v1183 = vmax.f32 %v1181, 0.0
      %v1184 = vmax.f32 %v1182, 0.0
      %1185 = vst [vmem:[#allocation3] sm:$0xff] 0.0
      %1186 = vst [vmem:[#allocation3 + $0x8] sm:$0xff] 0.0
      %1187 = vst [vmem:[#allocation3 + $0x10] sm:$0xff] 0.0
      %1188 = vst [vmem:[#allocation3 + $0x18] sm:$0xff] 0.0
      %1189 = vst [vmem:[#allocation3 + $0x8] sm:$0xff] %v1183
      %1190 = vst [vmem:[#allocation3 + $0x10] sm:$0xff] %v1184
      %v1191 = vld [vmem:[#allocation3] sm:$0xff]
      %v1192 = vld [vmem:[#allocation3 + $0x8] sm:$0xff]
      %v1193 = vld [vmem:[#allocation3 + $0x10] sm:$0xff]
      %1194 = vrot.lane.b32.xlu0 %v265, 111
      %v1195 = vpop.permute.xlu0 %1194
      %1196 = vrot.lane.b32.xlu0 %v269, 111
      %v1197 = vpop.permute.xlu0 %1196
      %v1198 = vsel %vm274, %v1195, %v1197
      %v1202 = vmul.f32 %v1191, %v1195
      %v1203 = vmul.f32 %v1192, %v1198
      %v1204 = vmul.f32 %v1193, %v1197
      %v1205 = vld [vmem:[%s3] sm:$0xff]
      %s1206 = scalar_lea.vmem %s3, 8
      %v1207 = vld [vmem:[%s1206] sm:$0xff]
      %1211 = vrot.lane.b32.xlu0 %v1191, 16
      %v1212 = vpop.permute.xlu0 %1211
      %1213 = vrot.lane.b32.xlu0 %v1192, 16
      %v1214 = vpop.permute.xlu0 %1213
      %1215 = vrot.lane.b32.xlu0 %v1193, 16
      %v1216 = vpop.permute.xlu0 %1215
      %v1217 = vsel %vm292, %v1212, %v1214
      %v1218 = vsel %vm292, %v1214, %v1216
      %vm1221 = vcmask 64512
      %v1223 = vsel %vm1221, %v1207, 0
      %1225 = vmatprep.subr.mxu0 %v1218
      %1226 = vmatpush1.msra.mxu0 %v1217
      %1227 = vmatprep.subr.mxu0 0.0
      %1228 = vmatpush1.msra.mxu0 0.0
      %1229 = vmatprep.subr.mxu0 0.0
      %1230 = vmatpush1.msra.mxu0 0.0
      %1231 = vmatprep.subr.mxu0 0.0
      %1232 = vmatpush1.msra.mxu0 0.0
      %1233 = vmatprep.subr.mxu0 0.0
      %1234 = vmatpush1.msra.mxu0 0.0
      %1235 = vmatprep.subr.mxu0 0.0
      %1236 = vmatpush1.msra.mxu0 0.0
      %1237 = vmatprep.subr.mxu0 0.0
      %1238 = vmatpush1.msra.mxu0 0.0
      %1239 = vmatprep.subr.mxu0 0.0
      %1240 = vmatpush1.msra.mxu0 0.0
      %1241 = vmatprep.subr.mxu0 0.0
      %1242 = vmatpush1.msra.mxu0 0.0
      %1243 = vmatprep.subr.mxu0 0.0
      %1244 = vmatpush1.msra.mxu0 0.0
      %1245 = vmatprep.subr.mxu0 0.0
      %1246 = vmatpush1.msra.mxu0 0.0
      %1247 = vmatprep.subr.mxu0 0.0
      %1248 = vmatpush1.msra.mxu0 0.0
      %1249 = vmatprep.subr.mxu0 0.0
      %1250 = vmatpush1.msra.mxu0 0.0
      %1251 = vmatprep.subr.mxu0 0.0
      %1252 = vmatpush1.msra.mxu0 0.0
      %1253 = vmatprep.subr.mxu0 0.0
      %1254 = vmatpush1.msra.mxu0 0.0
      %1255 = vmatprep.subr.mxu0 0.0
      %1256 = vmatpush1.msra.mxu0 0.0
      %1257 = vmatprep.subr.mxu0 0.0
      %1258 = vmatpush1.msra.mxu0 0.0
      %1259 = vmatprep.subr.mxu0 0.0
      %1260 = vmatpush1.msra.mxu0 0.0
      %1261 = vmatprep.subr.mxu0 0.0
      %1262 = vmatpush1.msra.mxu0 0.0
      %1263 = vmatprep.subr.mxu0 0.0
      %1264 = vmatpush1.msra.mxu0 0.0
      %1265 = vmatprep.subr.mxu0 0.0
      %1266 = vmatpush1.msra.mxu0 0.0
      %1267 = vmatprep.subr.mxu0 0.0
      %1268 = vmatpush1.msra.mxu0 0.0
      %1269 = vmatprep.subr.mxu0 0.0
      %1270 = vmatpush1.msra.mxu0 0.0
      %1271 = vmatprep.subr.mxu0 0.0
      %1272 = vmatpush1.msra.mxu0 0.0
      %1273 = vmatprep.subr.mxu0 0.0
      %1274 = vmatpush1.msra.mxu0 0.0
      %1275 = vmatprep.subr.mxu0 0.0
      %1276 = vmatpush1.msra.mxu0 0.0
      %1277 = vmatprep.subr.mxu0 0.0
      %1278 = vmatpush1.msra.mxu0 0.0
      %1279 = vmatprep.subr.mxu0 0.0
      %1280 = vmatpush1.msra.mxu0 0.0
      %1281 = vmatprep.subr.mxu0 0.0
      %1282 = vmatpush1.msra.mxu0 0.0
      %1283 = vmatprep.subr.mxu0 0.0
      %1284 = vmatpush1.msra.mxu0 0.0
      %1285 = vmatprep.subr.mxu0 0.0
      %1286 = vmatpush1.msra.mxu0 0.0
      %1287 = vmatprep.subr.mxu0 0.0
      %1288 = vmatpush1.msra.mxu0 0.0
      %1289 = vmatprep.mubr.f32.mxu0 0.0
      %1290 = vmatmul.mubr.f32.gmra.mrb[0].mxu0 %v1223
      %v1291 = vpop.f32.mrb[0].mxu0
      %v1292 = vadd.f32 0.0, %v1291
      %v1293 = vpop.f32.mrb[0].mxu0
      %v1294 = vadd.f32 0.0, %v1293
      %1295 = vdwg.mxu0
      %1299 = vrot.lane.b32.xlu0 %v1202, 17
      %v1300 = vpop.permute.xlu0 %1299
      %1301 = vrot.lane.b32.xlu0 %v1203, 17
      %v1302 = vpop.permute.xlu0 %1301
      %1303 = vrot.lane.b32.xlu0 %v1204, 17
      %v1304 = vpop.permute.xlu0 %1303
      %v1305 = vsel %vm384, %v1300, %v1302
      %v1306 = vsel %vm384, %v1302, %v1304
      %v1310 = vsel %vm1221, %v1205, 0
      %1312 = vmatprep.subr.mxu0 %v1306
      %1313 = vmatpush1.msra.mxu0 %v1305
      %1314 = vmatprep.subr.mxu0 0.0
      %1315 = vmatpush1.msra.mxu0 0.0
      %1316 = vmatprep.subr.mxu0 0.0
      %1317 = vmatpush1.msra.mxu0 0.0
      %1318 = vmatprep.subr.mxu0 0.0
      %1319 = vmatpush1.msra.mxu0 0.0
      %1320 = vmatprep.subr.mxu0 0.0
      %1321 = vmatpush1.msra.mxu0 0.0
      %1322 = vmatprep.subr.mxu0 0.0
      %1323 = vmatpush1.msra.mxu0 0.0
      %1324 = vmatprep.subr.mxu0 0.0
      %1325 = vmatpush1.msra.mxu0 0.0
      %1326 = vmatprep.subr.mxu0 0.0
      %1327 = vmatpush1.msra.mxu0 0.0
      %1328 = vmatprep.subr.mxu0 0.0
      %1329 = vmatpush1.msra.mxu0 0.0
      %1330 = vmatprep.subr.mxu0 0.0
      %1331 = vmatpush1.msra.mxu0 0.0
      %1332 = vmatprep.subr.mxu0 0.0
      %1333 = vmatpush1.msra.mxu0 0.0
      %1334 = vmatprep.subr.mxu0 0.0
      %1335 = vmatpush1.msra.mxu0 0.0
      %1336 = vmatprep.subr.mxu0 0.0
      %1337 = vmatpush1.msra.mxu0 0.0
      %1338 = vmatprep.subr.mxu0 0.0
      %1339 = vmatpush1.msra.mxu0 0.0
      %1340 = vmatprep.subr.mxu0 0.0
      %1341 = vmatpush1.msra.mxu0 0.0
      %1342 = vmatprep.subr.mxu0 0.0
      %1343 = vmatpush1.msra.mxu0 0.0
      %1344 = vmatprep.subr.mxu0 0.0
      %1345 = vmatpush1.msra.mxu0 0.0
      %1346 = vmatprep.subr.mxu0 0.0
      %1347 = vmatpush1.msra.mxu0 0.0
      %1348 = vmatprep.subr.mxu0 0.0
      %1349 = vmatpush1.msra.mxu0 0.0
      %1350 = vmatprep.subr.mxu0 0.0
      %1351 = vmatpush1.msra.mxu0 0.0
      %1352 = vmatprep.subr.mxu0 0.0
      %1353 = vmatpush1.msra.mxu0 0.0
      %1354 = vmatprep.subr.mxu0 0.0
      %1355 = vmatpush1.msra.mxu0 0.0
      %1356 = vmatprep.subr.mxu0 0.0
      %1357 = vmatpush1.msra.mxu0 0.0
      %1358 = vmatprep.subr.mxu0 0.0
      %1359 = vmatpush1.msra.mxu0 0.0
      %1360 = vmatprep.subr.mxu0 0.0
      %1361 = vmatpush1.msra.mxu0 0.0
      %1362 = vmatprep.subr.mxu0 0.0
      %1363 = vmatpush1.msra.mxu0 0.0
      %1364 = vmatprep.subr.mxu0 0.0
      %1365 = vmatpush1.msra.mxu0 0.0
      %1366 = vmatprep.subr.mxu0 0.0
      %1367 = vmatpush1.msra.mxu0 0.0
      %1368 = vmatprep.subr.mxu0 0.0
      %1369 = vmatpush1.msra.mxu0 0.0
      %1370 = vmatprep.subr.mxu0 0.0
      %1371 = vmatpush1.msra.mxu0 0.0
      %1372 = vmatprep.subr.mxu0 0.0
      %1373 = vmatpush1.msra.mxu0 0.0
      %1374 = vmatprep.subr.mxu0 0.0
      %1375 = vmatpush1.msra.mxu0 0.0
      %1376 = vmatprep.mubr.f32.mxu0 0.0
      %1377 = vmatmul.mubr.f32.gmra.mrb[0].mxu0 %v1310
      %v1378 = vpop.f32.mrb[0].mxu0
      %v1379 = vadd.f32 %v1292, %v1378
      %v1380 = vpop.f32.mrb[0].mxu0
      %v1381 = vadd.f32 %v1294, %v1380
      %1382 = vdwg.mxu0
      %1383 = vrot.lane.b32.xlu0 %v471, 113
      %v1384 = vpop.permute.xlu0 %1383
      %1385 = vrot.lane.b32.xlu0 %v475, 113
      %v1386 = vpop.permute.xlu0 %1385
      %v1387 = vsel %vm480, %v1384, %v1386
      %v1391 = vmul.f32 %v1191, %v1384
      %v1392 = vmul.f32 %v1192, %v1387
      %v1393 = vmul.f32 %v1193, %v1386
      %s1394 = scalar_lea.vmem %s3, 16
      %v1395 = vld [vmem:[%s1394] sm:$0xff]
      %1399 = vrot.lane.b32.xlu0 %v1391, 15
      %v1400 = vpop.permute.xlu0 %1399
      %1401 = vrot.lane.b32.xlu0 %v1392, 15
      %v1402 = vpop.permute.xlu0 %1401
      %1403 = vrot.lane.b32.xlu0 %v1393, 15
      %v1404 = vpop.permute.xlu0 %1403
      %v1405 = vsel %vm497, %v1400, %v1402
      %v1406 = vsel %vm497, %v1402, %v1404
      %v1410 = vsel %vm1221, %v1395, 0
      %1412 = vmatprep.subr.mxu0 %v1406
      %1413 = vmatpush1.msra.mxu0 %v1405
      %1414 = vmatprep.subr.mxu0 0.0
      %1415 = vmatpush1.msra.mxu0 0.0
      %1416 = vmatprep.subr.mxu0 0.0
      %1417 = vmatpush1.msra.mxu0 0.0
      %1418 = vmatprep.subr.mxu0 0.0
      %1419 = vmatpush1.msra.mxu0 0.0
      %1420 = vmatprep.subr.mxu0 0.0
      %1421 = vmatpush1.msra.mxu0 0.0
      %1422 = vmatprep.subr.mxu0 0.0
      %1423 = vmatpush1.msra.mxu0 0.0
      %1424 = vmatprep.subr.mxu0 0.0
      %1425 = vmatpush1.msra.mxu0 0.0
      %1426 = vmatprep.subr.mxu0 0.0
      %1427 = vmatpush1.msra.mxu0 0.0
      %1428 = vmatprep.subr.mxu0 0.0
      %1429 = vmatpush1.msra.mxu0 0.0
      %1430 = vmatprep.subr.mxu0 0.0
      %1431 = vmatpush1.msra.mxu0 0.0
      %1432 = vmatprep.subr.mxu0 0.0
      %1433 = vmatpush1.msra.mxu0 0.0
      %1434 = vmatprep.subr.mxu0 0.0
      %1435 = vmatpush1.msra.mxu0 0.0
      %1436 = vmatprep.subr.mxu0 0.0
      %1437 = vmatpush1.msra.mxu0 0.0
      %1438 = vmatprep.subr.mxu0 0.0
      %1439 = vmatpush1.msra.mxu0 0.0
      %1440 = vmatprep.subr.mxu0 0.0
      %1441 = vmatpush1.msra.mxu0 0.0
      %1442 = vmatprep.subr.mxu0 0.0
      %1443 = vmatpush1.msra.mxu0 0.0
      %1444 = vmatprep.subr.mxu0 0.0
      %1445 = vmatpush1.msra.mxu0 0.0
      %1446 = vmatprep.subr.mxu0 0.0
      %1447 = vmatpush1.msra.mxu0 0.0
      %1448 = vmatprep.subr.mxu0 0.0
      %1449 = vmatpush1.msra.mxu0 0.0
      %1450 = vmatprep.subr.mxu0 0.0
      %1451 = vmatpush1.msra.mxu0 0.0
      %1452 = vmatprep.subr.mxu0 0.0
      %1453 = vmatpush1.msra.mxu0 0.0
      %1454 = vmatprep.subr.mxu0 0.0
      %1455 = vmatpush1.msra.mxu0 0.0
      %1456 = vmatprep.subr.mxu0 0.0
      %1457 = vmatpush1.msra.mxu0 0.0
      %1458 = vmatprep.subr.mxu0 0.0
      %1459 = vmatpush1.msra.mxu0 0.0
      %1460 = vmatprep.subr.mxu0 0.0
      %1461 = vmatpush1.msra.mxu0 0.0
      %1462 = vmatprep.subr.mxu0 0.0
      %1463 = vmatpush1.msra.mxu0 0.0
      %1464 = vmatprep.subr.mxu0 0.0
      %1465 = vmatpush1.msra.mxu0 0.0
      %1466 = vmatprep.subr.mxu0 0.0
      %1467 = vmatpush1.msra.mxu0 0.0
      %1468 = vmatprep.subr.mxu0 0.0
      %1469 = vmatpush1.msra.mxu0 0.0
      %1470 = vmatprep.subr.mxu0 0.0
      %1471 = vmatpush1.msra.mxu0 0.0
      %1472 = vmatprep.subr.mxu0 0.0
      %1473 = vmatpush1.msra.mxu0 0.0
      %1474 = vmatprep.subr.mxu0 0.0
      %1475 = vmatpush1.msra.mxu0 0.0
      %1476 = vmatprep.mubr.f32.mxu0 0.0
      %1477 = vmatmul.mubr.f32.gmra.mrb[0].mxu0 %v1410
      %v1478 = vpop.f32.mrb[0].mxu0
      %v1479 = vadd.f32 0.0, %v1478
      %v1480 = vpop.f32.mrb[0].mxu0
      %v1481 = vadd.f32 0.0, %v1480
      %1482 = vdwg.mxu0
      %v1483 = vadd.f32 %v1379, %v1479
      %v1484 = vadd.f32 %v1381, %v1481
      %1485 = vrot.lane.b32.xlu0 %v265, 127
      %v1486 = vpop.permute.xlu0 %1485
      %1487 = vrot.lane.b32.xlu0 %v269, 127
      %v1488 = vpop.permute.xlu0 %1487
      %v1489 = vsel %vm585, %v1486, %v1488
      %v1493 = vmul.f32 %v1191, %v1486
      %v1494 = vmul.f32 %v1192, %v1489
      %v1495 = vmul.f32 %v1193, %v1488
      %s1496 = scalar_lea.vmem %s3, 24
      %v1497 = vld [vmem:[%s1496] sm:$0xff]
      %1501 = vrot.lane.b32.xlu0 %v1493, 1
      %v1502 = vpop.permute.xlu0 %1501
      %1503 = vrot.lane.b32.xlu0 %v1494, 1
      %v1504 = vpop.permute.xlu0 %1503
      %1505 = vrot.lane.b32.xlu0 %v1495, 1
      %v1506 = vpop.permute.xlu0 %1505
      %v1507 = vsel %vm602, %v1502, %v1504
      %v1508 = vsel %vm602, %v1504, %v1506
      %v1512 = vsel %vm1221, %v1497, 0
      %1514 = vmatprep.subr.mxu0 %v1508
      %1515 = vmatpush1.msra.mxu0 %v1507
      %1516 = vmatprep.subr.mxu0 0.0
      %1517 = vmatpush1.msra.mxu0 0.0
      %1518 = vmatprep.subr.mxu0 0.0
      %1519 = vmatpush1.msra.mxu0 0.0
      %1520 = vmatprep.subr.mxu0 0.0
      %1521 = vmatpush1.msra.mxu0 0.0
      %1522 = vmatprep.subr.mxu0 0.0
      %1523 = vmatpush1.msra.mxu0 0.0
      %1524 = vmatprep.subr.mxu0 0.0
      %1525 = vmatpush1.msra.mxu0 0.0
      %1526 = vmatprep.subr.mxu0 0.0
      %1527 = vmatpush1.msra.mxu0 0.0
      %1528 = vmatprep.subr.mxu0 0.0
      %1529 = vmatpush1.msra.mxu0 0.0
      %1530 = vmatprep.subr.mxu0 0.0
      %1531 = vmatpush1.msra.mxu0 0.0
      %1532 = vmatprep.subr.mxu0 0.0
      %1533 = vmatpush1.msra.mxu0 0.0
      %1534 = vmatprep.subr.mxu0 0.0
      %1535 = vmatpush1.msra.mxu0 0.0
      %1536 = vmatprep.subr.mxu0 0.0
      %1537 = vmatpush1.msra.mxu0 0.0
      %1538 = vmatprep.subr.mxu0 0.0
      %1539 = vmatpush1.msra.mxu0 0.0
      %1540 = vmatprep.subr.mxu0 0.0
      %1541 = vmatpush1.msra.mxu0 0.0
      %1542 = vmatprep.subr.mxu0 0.0
      %1543 = vmatpush1.msra.mxu0 0.0
      %1544 = vmatprep.subr.mxu0 0.0
      %1545 = vmatpush1.msra.mxu0 0.0
      %1546 = vmatprep.subr.mxu0 0.0
      %1547 = vmatpush1.msra.mxu0 0.0
      %1548 = vmatprep.subr.mxu0 0.0
      %1549 = vmatpush1.msra.mxu0 0.0
      %1550 = vmatprep.subr.mxu0 0.0
      %1551 = vmatpush1.msra.mxu0 0.0
      %1552 = vmatprep.subr.mxu0 0.0
      %1553 = vmatpush1.msra.mxu0 0.0
      %1554 = vmatprep.subr.mxu0 0.0
      %1555 = vmatpush1.msra.mxu0 0.0
      %1556 = vmatprep.subr.mxu0 0.0
      %1557 = vmatpush1.msra.mxu0 0.0
      %1558 = vmatprep.subr.mxu0 0.0
      %1559 = vmatpush1.msra.mxu0 0.0
      %1560 = vmatprep.subr.mxu0 0.0
      %1561 = vmatpush1.msra.mxu0 0.0
      %1562 = vmatprep.subr.mxu0 0.0
      %1563 = vmatpush1.msra.mxu0 0.0
      %1564 = vmatprep.subr.mxu0 0.0
      %1565 = vmatpush1.msra.mxu0 0.0
      %1566 = vmatprep.subr.mxu0 0.0
      %1567 = vmatpush1.msra.mxu0 0.0
      %1568 = vmatprep.subr.mxu0 0.0
      %1569 = vmatpush1.msra.mxu0 0.0
      %1570 = vmatprep.subr.mxu0 0.0
      %1571 = vmatpush1.msra.mxu0 0.0
      %1572 = vmatprep.subr.mxu0 0.0
      %1573 = vmatpush1.msra.mxu0 0.0
      %1574 = vmatprep.subr.mxu0 0.0
      %1575 = vmatpush1.msra.mxu0 0.0
      %1576 = vmatprep.subr.mxu0 0.0
      %1577 = vmatpush1.msra.mxu0 0.0
      %1578 = vmatprep.mubr.f32.mxu0 0.0
      %1579 = vmatmul.mubr.f32.gmra.mrb[0].mxu0 %v1512
      %v1580 = vpop.f32.mrb[0].mxu0
      %v1581 = vadd.f32 0.0, %v1580
      %v1582 = vpop.f32.mrb[0].mxu0
      %v1583 = vadd.f32 0.0, %v1582
      %1584 = vdwg.mxu0
      %v1585 = vadd.f32 %v1483, %v1581
      %v1586 = vadd.f32 %v1484, %v1583
      %s1587 = scalar_lea.vmem %s3, 32
      %v1588 = vld [vmem:[%s1587] sm:$0xff]
      %v1590 = vsel %vm1221, %v1588, 0
      %1592 = vmatprep.subr.mxu0 %v1193
      %1593 = vmatpush1.msra.mxu0 %v1192
      %1594 = vmatprep.subr.mxu0 0.0
      %1595 = vmatpush1.msra.mxu0 0.0
      %1596 = vmatprep.subr.mxu0 0.0
      %1597 = vmatpush1.msra.mxu0 0.0
      %1598 = vmatprep.subr.mxu0 0.0
      %1599 = vmatpush1.msra.mxu0 0.0
      %1600 = vmatprep.subr.mxu0 0.0
      %1601 = vmatpush1.msra.mxu0 0.0
      %1602 = vmatprep.subr.mxu0 0.0
      %1603 = vmatpush1.msra.mxu0 0.0
      %1604 = vmatprep.subr.mxu0 0.0
      %1605 = vmatpush1.msra.mxu0 0.0
      %1606 = vmatprep.subr.mxu0 0.0
      %1607 = vmatpush1.msra.mxu0 0.0
      %1608 = vmatprep.subr.mxu0 0.0
      %1609 = vmatpush1.msra.mxu0 0.0
      %1610 = vmatprep.subr.mxu0 0.0
      %1611 = vmatpush1.msra.mxu0 0.0
      %1612 = vmatprep.subr.mxu0 0.0
      %1613 = vmatpush1.msra.mxu0 0.0
      %1614 = vmatprep.subr.mxu0 0.0
      %1615 = vmatpush1.msra.mxu0 0.0
      %1616 = vmatprep.subr.mxu0 0.0
      %1617 = vmatpush1.msra.mxu0 0.0
      %1618 = vmatprep.subr.mxu0 0.0
      %1619 = vmatpush1.msra.mxu0 0.0
      %1620 = vmatprep.subr.mxu0 0.0
      %1621 = vmatpush1.msra.mxu0 0.0
      %1622 = vmatprep.subr.mxu0 0.0
      %1623 = vmatpush1.msra.mxu0 0.0
      %1624 = vmatprep.subr.mxu0 0.0
      %1625 = vmatpush1.msra.mxu0 0.0
      %1626 = vmatprep.subr.mxu0 0.0
      %1627 = vmatpush1.msra.mxu0 0.0
      %1628 = vmatprep.subr.mxu0 0.0
      %1629 = vmatpush1.msra.mxu0 0.0
      %1630 = vmatprep.subr.mxu0 0.0
      %1631 = vmatpush1.msra.mxu0 0.0
      %1632 = vmatprep.subr.mxu0 0.0
      %1633 = vmatpush1.msra.mxu0 0.0
      %1634 = vmatprep.subr.mxu0 0.0
      %1635 = vmatpush1.msra.mxu0 0.0
      %1636 = vmatprep.subr.mxu0 0.0
      %1637 = vmatpush1.msra.mxu0 0.0
      %1638 = vmatprep.subr.mxu0 0.0
      %1639 = vmatpush1.msra.mxu0 0.0
      %1640 = vmatprep.subr.mxu0 0.0
      %1641 = vmatpush1.msra.mxu0 0.0
      %1642 = vmatprep.subr.mxu0 0.0
      %1643 = vmatpush1.msra.mxu0 0.0
      %1644 = vmatprep.subr.mxu0 0.0
      %1645 = vmatpush1.msra.mxu0 0.0
      %1646 = vmatprep.subr.mxu0 0.0
      %1647 = vmatpush1.msra.mxu0 0.0
      %1648 = vmatprep.subr.mxu0 0.0
      %1649 = vmatpush1.msra.mxu0 0.0
      %1650 = vmatprep.subr.mxu0 0.0
      %1651 = vmatpush1.msra.mxu0 0.0
      %1652 = vmatprep.subr.mxu0 0.0
      %1653 = vmatpush1.msra.mxu0 0.0
      %1654 = vmatprep.subr.mxu0 0.0
      %1655 = vmatpush1.msra.mxu0 0.0
      %1656 = vmatprep.mubr.f32.mxu0 0.0
      %1657 = vmatmul.mubr.f32.gmra.mrb[0].mxu0 %v1590
      %v1658 = vpop.f32.mrb[0].mxu0
      %v1659 = vadd.f32 0.0, %v1658
      %v1660 = vpop.f32.mrb[0].mxu0
      %v1661 = vadd.f32 0.0, %v1660
      %1662 = vdwg.mxu0
      %v1663 = vadd.f32 %v1585, %v1659
      %v1664 = vadd.f32 %v1586, %v1661
      %v1665 = vld [vmem:[#allocation3 + $0x8] sm:$0xff]
      %v1666 = vld [vmem:[#allocation3 + $0x10] sm:$0xff]
      %v1667 = vld [vmem:[#allocation3 + $0x18] sm:$0xff]
      %1668 = vrot.lane.b32.xlu0 %v471, 1
      %v1669 = vpop.permute.xlu0 %1668
      %1670 = vrot.lane.b32.xlu0 %v475, 1
      %v1671 = vpop.permute.xlu0 %1670
      %v1672 = vsel %vm602, %v1669, %v1671
      %v1676 = vmul.f32 %v1665, %v1669
      %v1677 = vmul.f32 %v1666, %v1672
      %v1678 = vmul.f32 %v1667, %v1671
      %s1679 = scalar_lea.vmem %s3, 40
      %v1680 = vld [vmem:[%s1679] sm:$0xff]
      %1684 = vrot.lane.b32.xlu0 %v1676, 127
      %v1685 = vpop.permute.xlu0 %1684
      %1686 = vrot.lane.b32.xlu0 %v1677, 127
      %v1687 = vpop.permute.xlu0 %1686
      %1688 = vrot.lane.b32.xlu0 %v1678, 127
      %v1689 = vpop.permute.xlu0 %1688
      %v1690 = vsel %vm585, %v1685, %v1687
      %v1691 = vsel %vm585, %v1687, %v1689
      %v1695 = vsel %vm1221, %v1680, 0
      %1697 = vmatprep.subr.mxu0 %v1691
      %1698 = vmatpush1.msra.mxu0 %v1690
      %1699 = vmatprep.subr.mxu0 0.0
      %1700 = vmatpush1.msra.mxu0 0.0
      %1701 = vmatprep.subr.mxu0 0.0
      %1702 = vmatpush1.msra.mxu0 0.0
      %1703 = vmatprep.subr.mxu0 0.0
      %1704 = vmatpush1.msra.mxu0 0.0
      %1705 = vmatprep.subr.mxu0 0.0
      %1706 = vmatpush1.msra.mxu0 0.0
      %1707 = vmatprep.subr.mxu0 0.0
      %1708 = vmatpush1.msra.mxu0 0.0
      %1709 = vmatprep.subr.mxu0 0.0
      %1710 = vmatpush1.msra.mxu0 0.0
      %1711 = vmatprep.subr.mxu0 0.0
      %1712 = vmatpush1.msra.mxu0 0.0
      %1713 = vmatprep.subr.mxu0 0.0
      %1714 = vmatpush1.msra.mxu0 0.0
      %1715 = vmatprep.subr.mxu0 0.0
      %1716 = vmatpush1.msra.mxu0 0.0
      %1717 = vmatprep.subr.mxu0 0.0
      %1718 = vmatpush1.msra.mxu0 0.0
      %1719 = vmatprep.subr.mxu0 0.0
      %1720 = vmatpush1.msra.mxu0 0.0
      %1721 = vmatprep.subr.mxu0 0.0
      %1722 = vmatpush1.msra.mxu0 0.0
      %1723 = vmatprep.subr.mxu0 0.0
      %1724 = vmatpush1.msra.mxu0 0.0
      %1725 = vmatprep.subr.mxu0 0.0
      %1726 = vmatpush1.msra.mxu0 0.0
      %1727 = vmatprep.subr.mxu0 0.0
      %1728 = vmatpush1.msra.mxu0 0.0
      %1729 = vmatprep.subr.mxu0 0.0
      %1730 = vmatpush1.msra.mxu0 0.0
      %1731 = vmatprep.subr.mxu0 0.0
      %1732 = vmatpush1.msra.mxu0 0.0
      %1733 = vmatprep.subr.mxu0 0.0
      %1734 = vmatpush1.msra.mxu0 0.0
      %1735 = vmatprep.subr.mxu0 0.0
      %1736 = vmatpush1.msra.mxu0 0.0
      %1737 = vmatprep.subr.mxu0 0.0
      %1738 = vmatpush1.msra.mxu0 0.0
      %1739 = vmatprep.subr.mxu0 0.0
      %1740 = vmatpush1.msra.mxu0 0.0
      %1741 = vmatprep.subr.mxu0 0.0
      %1742 = vmatpush1.msra.mxu0 0.0
      %1743 = vmatprep.subr.mxu0 0.0
      %1744 = vmatpush1.msra.mxu0 0.0
      %1745 = vmatprep.subr.mxu0 0.0
      %1746 = vmatpush1.msra.mxu0 0.0
      %1747 = vmatprep.subr.mxu0 0.0
      %1748 = vmatpush1.msra.mxu0 0.0
      %1749 = vmatprep.subr.mxu0 0.0
      %1750 = vmatpush1.msra.mxu0 0.0
      %1751 = vmatprep.subr.mxu0 0.0
      %1752 = vmatpush1.msra.mxu0 0.0
      %1753 = vmatprep.subr.mxu0 0.0
      %1754 = vmatpush1.msra.mxu0 0.0
      %1755 = vmatprep.subr.mxu0 0.0
      %1756 = vmatpush1.msra.mxu0 0.0
      %1757 = vmatprep.subr.mxu0 0.0
      %1758 = vmatpush1.msra.mxu0 0.0
      %1759 = vmatprep.subr.mxu0 0.0
      %1760 = vmatpush1.msra.mxu0 0.0
      %1761 = vmatprep.mubr.f32.mxu0 0.0
      %1762 = vmatmul.mubr.f32.gmra.mrb[0].mxu0 %v1695
      %v1763 = vpop.f32.mrb[0].mxu0
      %v1764 = vadd.f32 0.0, %v1763
      %v1765 = vpop.f32.mrb[0].mxu0
      %v1766 = vadd.f32 0.0, %v1765
      %1767 = vdwg.mxu0
      %v1768 = vadd.f32 %v1663, %v1764
      %v1769 = vadd.f32 %v1664, %v1766
      %1770 = vrot.lane.b32.xlu0 %v265, 15
      %v1771 = vpop.permute.xlu0 %1770
      %1772 = vrot.lane.b32.xlu0 %v269, 15
      %v1773 = vpop.permute.xlu0 %1772
      %v1774 = vsel %vm497, %v1771, %v1773
      %v1778 = vmul.f32 %v1665, %v1771
      %v1779 = vmul.f32 %v1666, %v1774
      %v1780 = vmul.f32 %v1667, %v1773
      %s1781 = scalar_lea.vmem %s3, 48
      %v1782 = vld [vmem:[%s1781] sm:$0xff]
      %1786 = vrot.lane.b32.xlu0 %v1778, 113
      %v1787 = vpop.permute.xlu0 %1786
      %1788 = vrot.lane.b32.xlu0 %v1779, 113
      %v1789 = vpop.permute.xlu0 %1788
      %1790 = vrot.lane.b32.xlu0 %v1780, 113
      %v1791 = vpop.permute.xlu0 %1790
      %v1792 = vsel %vm480, %v1787, %v1789
      %v1793 = vsel %vm480, %v1789, %v1791
      %v1797 = vsel %vm1221, %v1782, 0
      %1799 = vmatprep.subr.mxu0 %v1793
      %1800 = vmatpush1.msra.mxu0 %v1792
      %1801 = vmatprep.subr.mxu0 0.0
      %1802 = vmatpush1.msra.mxu0 0.0
      %1803 = vmatprep.subr.mxu0 0.0
      %1804 = vmatpush1.msra.mxu0 0.0
      %1805 = vmatprep.subr.mxu0 0.0
      %1806 = vmatpush1.msra.mxu0 0.0
      %1807 = vmatprep.subr.mxu0 0.0
      %1808 = vmatpush1.msra.mxu0 0.0
      %1809 = vmatprep.subr.mxu0 0.0
      %1810 = vmatpush1.msra.mxu0 0.0
      %1811 = vmatprep.subr.mxu0 0.0
      %1812 = vmatpush1.msra.mxu0 0.0
      %1813 = vmatprep.subr.mxu0 0.0
      %1814 = vmatpush1.msra.mxu0 0.0
      %1815 = vmatprep.subr.mxu0 0.0
      %1816 = vmatpush1.msra.mxu0 0.0
      %1817 = vmatprep.subr.mxu0 0.0
      %1818 = vmatpush1.msra.mxu0 0.0
      %1819 = vmatprep.subr.mxu0 0.0
      %1820 = vmatpush1.msra.mxu0 0.0
      %1821 = vmatprep.subr.mxu0 0.0
      %1822 = vmatpush1.msra.mxu0 0.0
      %1823 = vmatprep.subr.mxu0 0.0
      %1824 = vmatpush1.msra.mxu0 0.0
      %1825 = vmatprep.subr.mxu0 0.0
      %1826 = vmatpush1.msra.mxu0 0.0
      %1827 = vmatprep.subr.mxu0 0.0
      %1828 = vmatpush1.msra.mxu0 0.0
      %1829 = vmatprep.subr.mxu0 0.0
      %1830 = vmatpush1.msra.mxu0 0.0
      %1831 = vmatprep.subr.mxu0 0.0
      %1832 = vmatpush1.msra.mxu0 0.0
      %1833 = vmatprep.subr.mxu0 0.0
      %1834 = vmatpush1.msra.mxu0 0.0
      %1835 = vmatprep.subr.mxu0 0.0
      %1836 = vmatpush1.msra.mxu0 0.0
      %1837 = vmatprep.subr.mxu0 0.0
      %1838 = vmatpush1.msra.mxu0 0.0
      %1839 = vmatprep.subr.mxu0 0.0
      %1840 = vmatpush1.msra.mxu0 0.0
      %1841 = vmatprep.subr.mxu0 0.0
      %1842 = vmatpush1.msra.mxu0 0.0
      %1843 = vmatprep.subr.mxu0 0.0
      %1844 = vmatpush1.msra.mxu0 0.0
      %1845 = vmatprep.subr.mxu0 0.0
      %1846 = vmatpush1.msra.mxu0 0.0
      %1847 = vmatprep.subr.mxu0 0.0
      %1848 = vmatpush1.msra.mxu0 0.0
      %1849 = vmatprep.subr.mxu0 0.0
      %1850 = vmatpush1.msra.mxu0 0.0
      %1851 = vmatprep.subr.mxu0 0.0
      %1852 = vmatpush1.msra.mxu0 0.0
      %1853 = vmatprep.subr.mxu0 0.0
      %1854 = vmatpush1.msra.mxu0 0.0
      %1855 = vmatprep.subr.mxu0 0.0
      %1856 = vmatpush1.msra.mxu0 0.0
      %1857 = vmatprep.subr.mxu0 0.0
      %1858 = vmatpush1.msra.mxu0 0.0
      %1859 = vmatprep.subr.mxu0 0.0
      %1860 = vmatpush1.msra.mxu0 0.0
      %1861 = vmatprep.subr.mxu0 0.0
      %1862 = vmatpush1.msra.mxu0 0.0
      %1863 = vmatprep.mubr.f32.mxu0 0.0
      %1864 = vmatmul.mubr.f32.gmra.mrb[0].mxu0 %v1797
      %v1865 = vpop.f32.mrb[0].mxu0
      %v1866 = vadd.f32 0.0, %v1865
      %v1867 = vpop.f32.mrb[0].mxu0
      %v1868 = vadd.f32 0.0, %v1867
      %1869 = vdwg.mxu0
      %v1870 = vadd.f32 %v1768, %v1866
      %v1871 = vadd.f32 %v1769, %v1868
      %s1872 = scalar_lea.vmem %s3, 56
      %v1873 = vld [vmem:[%s1872] sm:$0xff]
      %1877 = vrot.lane.b32.xlu0 %v1665, 112
      %v1878 = vpop.permute.xlu0 %1877
      %1879 = vrot.lane.b32.xlu0 %v1666, 112
      %v1880 = vpop.permute.xlu0 %1879
      %1881 = vrot.lane.b32.xlu0 %v1667, 112
      %v1882 = vpop.permute.xlu0 %1881
      %v1883 = vsel %vm989, %v1878, %v1880
      %v1884 = vsel %vm989, %v1880, %v1882
      %v1888 = vsel %vm1221, %v1873, 0
      %1890 = vmatprep.subr.mxu0 %v1884
      %1891 = vmatpush1.msra.mxu0 %v1883
      %1892 = vmatprep.subr.mxu0 0.0
      %1893 = vmatpush1.msra.mxu0 0.0
      %1894 = vmatprep.subr.mxu0 0.0
      %1895 = vmatpush1.msra.mxu0 0.0
      %1896 = vmatprep.subr.mxu0 0.0
      %1897 = vmatpush1.msra.mxu0 0.0
      %1898 = vmatprep.subr.mxu0 0.0
      %1899 = vmatpush1.msra.mxu0 0.0
      %1900 = vmatprep.subr.mxu0 0.0
      %1901 = vmatpush1.msra.mxu0 0.0
      %1902 = vmatprep.subr.mxu0 0.0
      %1903 = vmatpush1.msra.mxu0 0.0
      %1904 = vmatprep.subr.mxu0 0.0
      %1905 = vmatpush1.msra.mxu0 0.0
      %1906 = vmatprep.subr.mxu0 0.0
      %1907 = vmatpush1.msra.mxu0 0.0
      %1908 = vmatprep.subr.mxu0 0.0
      %1909 = vmatpush1.msra.mxu0 0.0
      %1910 = vmatprep.subr.mxu0 0.0
      %1911 = vmatpush1.msra.mxu0 0.0
      %1912 = vmatprep.subr.mxu0 0.0
      %1913 = vmatpush1.msra.mxu0 0.0
      %1914 = vmatprep.subr.mxu0 0.0
      %1915 = vmatpush1.msra.mxu0 0.0
      %1916 = vmatprep.subr.mxu0 0.0
      %1917 = vmatpush1.msra.mxu0 0.0
      %1918 = vmatprep.subr.mxu0 0.0
      %1919 = vmatpush1.msra.mxu0 0.0
      %1920 = vmatprep.subr.mxu0 0.0
      %1921 = vmatpush1.msra.mxu0 0.0
      %1922 = vmatprep.subr.mxu0 0.0
      %1923 = vmatpush1.msra.mxu0 0.0
      %1924 = vmatprep.subr.mxu0 0.0
      %1925 = vmatpush1.msra.mxu0 0.0
      %1926 = vmatprep.subr.mxu0 0.0
      %1927 = vmatpush1.msra.mxu0 0.0
      %1928 = vmatprep.subr.mxu0 0.0
      %1929 = vmatpush1.msra.mxu0 0.0
      %1930 = vmatprep.subr.mxu0 0.0
      %1931 = vmatpush1.msra.mxu0 0.0
      %1932 = vmatprep.subr.mxu0 0.0
      %1933 = vmatpush1.msra.mxu0 0.0
      %1934 = vmatprep.subr.mxu0 0.0
      %1935 = vmatpush1.msra.mxu0 0.0
      %1936 = vmatprep.subr.mxu0 0.0
      %1937 = vmatpush1.msra.mxu0 0.0
      %1938 = vmatprep.subr.mxu0 0.0
      %1939 = vmatpush1.msra.mxu0 0.0
      %1940 = vmatprep.subr.mxu0 0.0
      %1941 = vmatpush1.msra.mxu0 0.0
      %1942 = vmatprep.subr.mxu0 0.0
      %1943 = vmatpush1.msra.mxu0 0.0
      %1944 = vmatprep.subr.mxu0 0.0
      %1945 = vmatpush1.msra.mxu0 0.0
      %1946 = vmatprep.subr.mxu0 0.0
      %1947 = vmatpush1.msra.mxu0 0.0
      %1948 = vmatprep.subr.mxu0 0.0
      %1949 = vmatpush1.msra.mxu0 0.0
      %1950 = vmatprep.subr.mxu0 0.0
      %1951 = vmatpush1.msra.mxu0 0.0
      %1952 = vmatprep.subr.mxu0 0.0
      %1953 = vmatpush1.msra.mxu0 0.0
      %1954 = vmatprep.mubr.f32.mxu0 0.0
      %1955 = vmatmul.mubr.f32.gmra.mrb[0].mxu0 %v1888
      %v1956 = vpop.f32.mrb[0].mxu0
      %v1957 = vadd.f32 0.0, %v1956
      %v1958 = vpop.f32.mrb[0].mxu0
      %v1959 = vadd.f32 0.0, %v1958
      %1960 = vdwg.mxu0
      %v1961 = vadd.f32 %v1870, %v1957
      %v1962 = vadd.f32 %v1871, %v1959
      %1963 = vrot.lane.b32.xlu0 %v471, 17
      %v1964 = vpop.permute.xlu0 %1963
      %1965 = vrot.lane.b32.xlu0 %v475, 17
      %v1966 = vpop.permute.xlu0 %1965
      %v1967 = vsel %vm384, %v1964, %v1966
      %v1971 = vmul.f32 %v1665, %v1964
      %v1972 = vmul.f32 %v1666, %v1967
      %v1973 = vmul.f32 %v1667, %v1966
      %s1974 = scalar_lea.vmem %s3, 64
      %v1975 = vld [vmem:[%s1974] sm:$0xff]
      %1979 = vrot.lane.b32.xlu0 %v1971, 111
      %v1980 = vpop.permute.xlu0 %1979
      %1981 = vrot.lane.b32.xlu0 %v1972, 111
      %v1982 = vpop.permute.xlu0 %1981
      %1983 = vrot.lane.b32.xlu0 %v1973, 111
      %v1984 = vpop.permute.xlu0 %1983
      %v1985 = vsel %vm274, %v1980, %v1982
      %v1986 = vsel %vm274, %v1982, %v1984
      %v1990 = vsel %vm1221, %v1975, 0
      %1992 = vmatprep.subr.mxu0 %v1986
      %1993 = vmatpush1.msra.mxu0 %v1985
      %1994 = vmatprep.subr.mxu0 0.0
      %1995 = vmatpush1.msra.mxu0 0.0
      %1996 = vmatprep.subr.mxu0 0.0
      %1997 = vmatpush1.msra.mxu0 0.0
      %1998 = vmatprep.subr.mxu0 0.0
      %1999 = vmatpush1.msra.mxu0 0.0
      %2000 = vmatprep.subr.mxu0 0.0
      %2001 = vmatpush1.msra.mxu0 0.0
      %2002 = vmatprep.subr.mxu0 0.0
      %2003 = vmatpush1.msra.mxu0 0.0
      %2004 = vmatprep.subr.mxu0 0.0
      %2005 = vmatpush1.msra.mxu0 0.0
      %2006 = vmatprep.subr.mxu0 0.0
      %2007 = vmatpush1.msra.mxu0 0.0
      %2008 = vmatprep.subr.mxu0 0.0
      %2009 = vmatpush1.msra.mxu0 0.0
      %2010 = vmatprep.subr.mxu0 0.0
      %2011 = vmatpush1.msra.mxu0 0.0
      %2012 = vmatprep.subr.mxu0 0.0
      %2013 = vmatpush1.msra.mxu0 0.0
      %2014 = vmatprep.subr.mxu0 0.0
      %2015 = vmatpush1.msra.mxu0 0.0
      %2016 = vmatprep.subr.mxu0 0.0
      %2017 = vmatpush1.msra.mxu0 0.0
      %2018 = vmatprep.subr.mxu0 0.0
      %2019 = vmatpush1.msra.mxu0 0.0
      %2020 = vmatprep.subr.mxu0 0.0
      %2021 = vmatpush1.msra.mxu0 0.0
      %2022 = vmatprep.subr.mxu0 0.0
      %2023 = vmatpush1.msra.mxu0 0.0
      %2024 = vmatprep.subr.mxu0 0.0
      %2025 = vmatpush1.msra.mxu0 0.0
      %2026 = vmatprep.subr.mxu0 0.0
      %2027 = vmatpush1.msra.mxu0 0.0
      %2028 = vmatprep.subr.mxu0 0.0
      %2029 = vmatpush1.msra.mxu0 0.0
      %2030 = vmatprep.subr.mxu0 0.0
      %2031 = vmatpush1.msra.mxu0 0.0
      %2032 = vmatprep.subr.mxu0 0.0
      %2033 = vmatpush1.msra.mxu0 0.0
      %2034 = vmatprep.subr.mxu0 0.0
      %2035 = vmatpush1.msra.mxu0 0.0
      %2036 = vmatprep.subr.mxu0 0.0
      %2037 = vmatpush1.msra.mxu0 0.0
      %2038 = vmatprep.subr.mxu0 0.0
      %2039 = vmatpush1.msra.mxu0 0.0
      %2040 = vmatprep.subr.mxu0 0.0
      %2041 = vmatpush1.msra.mxu0 0.0
      %2042 = vmatprep.subr.mxu0 0.0
      %2043 = vmatpush1.msra.mxu0 0.0
      %2044 = vmatprep.subr.mxu0 0.0
      %2045 = vmatpush1.msra.mxu0 0.0
      %2046 = vmatprep.subr.mxu0 0.0
      %2047 = vmatpush1.msra.mxu0 0.0
      %2048 = vmatprep.subr.mxu0 0.0
      %2049 = vmatpush1.msra.mxu0 0.0
      %2050 = vmatprep.subr.mxu0 0.0
      %2051 = vmatpush1.msra.mxu0 0.0
      %2052 = vmatprep.subr.mxu0 0.0
      %2053 = vmatpush1.msra.mxu0 0.0
      %2054 = vmatprep.subr.mxu0 0.0
      %2055 = vmatpush1.msra.mxu0 0.0
      %2056 = vmatprep.mubr.f32.mxu0 0.0
      %2057 = vmatmul.mubr.f32.gmra.mrb[0].mxu0 %v1990
      %v2058 = vpop.f32.mrb[0].mxu0
      %v2059 = vadd.f32 0.0, %v2058
      %v2060 = vpop.f32.mrb[0].mxu0
      %v2061 = vadd.f32 0.0, %v2060
      %2062 = vdwg.mxu0
      %v2063 = vadd.f32 %v1961, %v2059
      %v2064 = vadd.f32 %v1962, %v2061
      %v2065 = vld [vmem:[%s4] sm:$0xff]
      %2067 = vset.pattern.permute.xlu0 0
      %2068 = vperm.xlu0 %2067, %v2065
      %v2069 = vpop.permute.xlu0 %2068
      %v2071 = vadd.f32 %v2063, %v2069
      %v2072 = vadd.f32 %v2064, %v2069
      %v2073 = vmax.f32 %v2071, 0.0
      %v2074 = vmax.f32 %v2072, 0.0
      %2075 = vst [vmem:[%s251] sm:$0xff] %v2073
      %2076 = vst [vmem:[%s251 + $0x8] sm:$0xff] %v2074
      %p2077 = scmp.lt.s32.totalorder %s17, 1
      %s2078 = scalar_select %p2077, %s17, 1
      %s2079 = smul.addr %s2078, 2
      %s2080 = smul.addr %s2079, 8
      %s2081 = scalar_lea.vmem %s6, %s2080
      // Predicated region
      $region45: #{downsample.1} parent=43 // pred_check
        %p2082 = pneg %p166
      $region46: #{downsample.1} parent=43 // pred_check_branch
        %2084 = sbr.rel (%p2082) target = $region48
      $region47: #{downsample.1} parent=43 // pred_region
        _
      $region48: #{downsample.1} parent=43 // pred_fallthru
        _
    $region44: #{downsample.1} parent=5 // pred_fallthru
      _
    %p2085 = scmp.le.s32.totalorder 2, %s12
    // Predicated region
    $region49: #{downsample.1} parent=5 // pred_check
      %p2086 = pneg %p2085
    $region50: #{downsample.1} parent=5 // pred_check_branch
      %2088 = sbr.rel (%p2086) target = $region52
    $region51: #{downsample.1} parent=5 // pred_region
      %s2089 = ssub.s32 %s12, 2
      // Predicated region
      $region53: #{downsample.1} parent=51 // pred_check
        %p2090 = pneg %p172
      $region54: #{downsample.1} parent=51 // pred_check_branch
        %2092 = sbr.rel (%p2090) target = $region56
      $region55: #{downsample.1} parent=51 // pred_region
        %p2093 = scmp.lt.s32.totalorder %s18, 1
        %s2094 = scalar_select %p2093, %s18, 1
        %s2095 = smul.addr %s2094, 2
        %s2096 = smul.addr %s2095, 8
        %s2097 = scalar_lea.vmem %s6, %s2096
      $region56: #{downsample.1} parent=51 // pred_fallthru
        _
    $region52: #{downsample.1} parent=5 // pred_fallthru
      _
  $region6: #{downsample.1} parent=0 // loop_footer
    %s16 = sadd.s32 1, %s12
  $region7: #{downsample.1} parent=0 // loop_footer_branch
    %11 = sbr.rel target = $region3
  $region8: #{downsample.1} parent=0 // loop_exit
    _

</llo_original>
